<compile_context>
chip_gen: v5e
topology: v5e:2x2
jax: 0.10.0
libtpu: 0.0.40
codegen_flags: <defaults>
</compile_context>

<pallas_src>
import functools
import math

import numpy as np
import jax
import jax.numpy as jnp
from jax.experimental import pallas as pl
from jax.experimental.pallas import tpu as pltpu


# ---------------------------------------------------------------------------
# VMEM budgeting helpers
# ---------------------------------------------------------------------------
_DEF_VMEM = 64 * 1024 * 1024        # conservative default = v7x per-core VMEM


def _vmem_capacity_bytes():
    try:
        info = pltpu.get_tpu_info()
        cap = getattr(info, "vmem_capacity_bytes", None)
        if cap:
            return int(cap)
    except Exception:
        pass
    return _DEF_VMEM


def _vmem_limit(need_bytes, cap_bytes):
    # Default scoped VMEM is only 16 MiB (v5e) / 32 MiB (v6e/v7x); set an
    # explicit limit with headroom over the computed footprint, clamped below
    # physical capacity.
    return int(min(cap_bytes * 0.9, max(1.5 * need_bytes, 32 * 1024 * 1024)))


# ---------------------------------------------------------------------------
# Q/K/V projection: x @ W + b, written HEAD-MAJOR (B, H, L, E) directly so the
# wrapper never pays an HBM transpose.
# ---------------------------------------------------------------------------
def _qkv_proj_kernel(x_ref, w_ref, b_ref, o_ref, *, heads_per_block, head_dim):
    # x_ref: (1, bn, D)  w_ref: (D, G*E)  b_ref: (1, G*E)  o_ref: (1, G, bn, E)
    x = x_ref[0]
    y = jnp.dot(x, w_ref[...], preferred_element_type=jnp.float32)
    y = y + b_ref[...].astype(jnp.float32)
    # Split the lane-dense GEMM result into per-head stores (in-VMEM relayout,
    # replaces the old HBM transpose round trip).
    for g in range(heads_per_block):
        o_ref[0, g] = y[:, g * head_dim:(g + 1) * head_dim].astype(o_ref.dtype)


def _proj_tile_bytes(bn, D, g, E, x_isz, w_isz, o_isz):
    return (2 * bn * D * x_isz          # x block (double-buffered)
            + 2 * D * g * E * w_isz     # weight block
            + 2 * g * bn * E * o_isz    # head-major output block
            + 2 * bn * g * E * 4        # f32 GEMM intermediate (+slack)
            + (1 << 20))


def _proj_head_group(H, E, D, bn, x_isz, w_isz, o_isz, budget):
    # Legal groups: the W block lane width (g*E) must be a multiple of 128 or
    # the full output width.  Prefer the largest group (fewest passes over x)
    # whose footprint fits the budget (this is the Dout tiling for large D).
    legal = [g for g in range(1, H + 1)
             if H % g == 0 and ((g * E) % 128 == 0 or g == H)]
    for g in sorted(legal, reverse=True):
        if _proj_tile_bytes(bn, D, g, E, x_isz, w_isz, o_isz) <= budget:
            return g
    return min(legal)


def project_to_heads(x, w, b, *, n_heads, head_dim, out_dtype):
    """x: (B, Lx, D), w: (D, H*E), b: (H*E,) -> (B, H, Lx, E)."""
    B, Lx, D = x.shape
    H, E = n_heads, head_dim
    cap = _vmem_capacity_bytes()
    bn = Lx if Lx <= 256 else 256
    x_isz = jnp.dtype(x.dtype).itemsize
    w_isz = jnp.dtype(w.dtype).itemsize
    o_isz = jnp.dtype(out_dtype).itemsize
    G = _proj_head_group(H, E, D, bn, x_isz, w_isz, o_isz,
                         budget=int(0.55 * cap))
    n_hg = H // G
    need = _proj_tile_bytes(bn, D, G, E, x_isz, w_isz, o_isz)
    b2 = b.reshape(1, H * E)
    kernel = functools.partial(_qkv_proj_kernel, heads_per_block=G, head_dim=E)

    # Head-group outermost: the weight block stays VMEM-resident across the
    # whole (B, Lx) sweep (fetched once per group).
    return pl.pallas_call(
        kernel,
        out_shape=jax.ShapeDtypeStruct((B, H, Lx, E), out_dtype),
        grid=(n_hg, B, pl.cdiv(Lx, bn)),
        in_specs=[
            pl.BlockSpec((1, bn, D), lambda hg, bb, l: (bb, l, 0)),
            pl.BlockSpec((D, G * E), lambda hg, bb, l: (0, hg)),
            pl.BlockSpec((1, G * E), lambda hg, bb, l: (0, hg)),
        ],
        out_specs=pl.BlockSpec((1, G, bn, E), lambda hg, bb, l: (bb, hg, l, 0)),
        compiler_params=pltpu.CompilerParams(
            dimension_semantics=("parallel", "parallel", "parallel"),
            vmem_limit_bytes=_vmem_limit(need, cap)),
    )(x, w, b2)


# ---------------------------------------------------------------------------
# Output projection: consumes head-major (B, H, L, E) directly; contraction
# over (H, E), Dout tiled by tn.
# ---------------------------------------------------------------------------
def _out_proj_kernel(x_ref, w_ref, b_ref, o_ref, *, n_heads):
    # x_ref: (1, H, bl, E)  w_ref: (H, E, tn)  b_ref: (1, tn)  o_ref: (1, bl, tn)
    acc = jnp.dot(x_ref[0, 0], w_ref[0], preferred_element_type=jnp.float32)
    for h in range(1, n_heads):
        acc = acc + jnp.dot(x_ref[0, h], w_ref[h],
                            preferred_element_type=jnp.float32)
    o_ref[0] = (acc + b_ref[...].astype(jnp.float32)).astype(o_ref.dtype)


def _choose_tn(D):
    if D <= 512 or D % 128 != 0:
        return D
    for tn in (512, 256, 128):
        if D % tn == 0:
            return tn
    return D


def project_from_heads(x_heads, w, b, *, out_dtype):
    """x_heads: (B, H, L, E), w: (H*E, D), b: (D,) -> (B, L, D)."""
    B, H, L, E = x_heads.shape
    D = w.shape[1]
    cap = _vmem_capacity_bytes()
    bl = L if L <= 256 else 256
    tn = _choose_tn(D)
    x_isz = jnp.dtype(x_heads.dtype).itemsize
    w_isz = jnp.dtype(w.dtype).itemsize
    o_isz = jnp.dtype(out_dtype).itemsize
    need = (2 * H * bl * E * x_isz + 2 * H * E * tn * w_isz
            + 2 * bl * tn * o_isz + bl * tn * 4 + (1 << 20))
    w3 = w.reshape(H, E, D)            # free row-major split of the leading dim
    b2 = b.reshape(1, D)
    kernel = functools.partial(_out_proj_kernel, n_heads=H)

    return pl.pallas_call(
        kernel,
        out_shape=jax.ShapeDtypeStruct((B, L, D), out_dtype),
        grid=(pl.cdiv(D, tn), B, pl.cdiv(L, bl)),
        in_specs=[
            pl.BlockSpec((1, H, bl, E), lambda j, bb, l: (bb, 0, l, 0)),
            pl.BlockSpec((H, E, tn), lambda j, bb, l: (0, 0, j)),
            pl.BlockSpec((1, tn), lambda j, bb, l: (0, j)),
        ],
        out_specs=pl.BlockSpec((1, bl, tn), lambda j, bb, l: (bb, l, j)),
        compiler_params=pltpu.CompilerParams(
            dimension_semantics=("parallel", "parallel", "parallel"),
            vmem_limit_bytes=_vmem_limit(need, cap)),
    )(x_heads, w3, b2)


# ---------------------------------------------------------------------------
# Attention: one (batch, head-group, L-tile) per grid step; G heads batched.
# ---------------------------------------------------------------------------
def _attn_kernel(q_ref, k_ref, v_ref, o_ref, a_ref, *, scale):
    # q_ref: (1, G, bl, E)   k_ref/v_ref: (1, G, S, E)
    q = q_ref[0]
    k = k_ref[0]
    v = v_ref[0]
    qs = q * scale                     # fold 1/sqrt(E) into the (bl,E) operand
    s = jnp.einsum("gle,gse->gls", qs, k,
                   preferred_element_type=jnp.float32)        # (G, bl, S)
    m = jnp.max(s, axis=-1, keepdims=True)
    p = jnp.exp(s - m)
    denom = jnp.sum(p, axis=-1, keepdims=True)
    # Exact reciprocal (cost is only a (G,bl,1) divide) so the attention rows
    # returned to the caller sum to 1; normalize once and reuse for both the
    # A@V matmul and the attn store (one fewer (bl,S) pass).
    pn = (p / denom).astype(o_ref.dtype)
    out = jnp.einsum("gls,gse->gle", pn, v,
                     preferred_element_type=jnp.float32)
    a_ref[0] = pn.astype(a_ref.dtype)
    o_ref[0] = out.astype(o_ref.dtype)
    # TODO(synk): on v6e/v7x a bf16 exp (EUP-bound regime when E <= 128) is a
    # further ~2x lever; kept f32 here for exactness on all generations.


def _attn_head_group(H, E):
    if E >= 128:
        return 1
    for g in range(1, H + 1):
        if H % g == 0 and g * E >= 128:
            return g
    return H


def _attn_tile_bytes(G, bl, S, E, in_isz, attn_isz):
    return (2 * 2 * G * bl * E * in_isz        # q + out blocks (double-buffered)
            + 2 * 2 * G * S * E * in_isz       # k + v blocks (double-buffered)
            + 2 * G * bl * S * attn_isz        # attn output block (double-buffered)
            + G * bl * S * (4 + 4 + in_isz)    # f32 scores, f32 p, normalized p
            + 2 * G * bl * E * 4               # f32 out intermediate (+slack)
            + (1 << 20))


def _choose_block_l(L, S, E, G, in_isz, attn_isz, budget):
    if L <= 128:
        return L
    for bl in (512, 256, 128):
        if bl <= L and _attn_tile_bytes(G, bl, S, E, in_isz, attn_isz) <= budget:
            return bl
    # Floor at 128: lane/sublane-dense stores and a full MXU M dim beat tiny bl.
    return 128


def multihead_attention(q, k, v):
    """q: (B,H,L,E), k/v: (B,H,S,E) -> (out (B,H,L,E), attn (B,H,L,S))."""
    B, H, L, E = q.shape
    S = k.shape[2]
    scale = 1.0 / math.sqrt(E)
    attn_dtype = q.dtype
    in_isz = jnp.dtype(q.dtype).itemsize
    attn_isz = jnp.dtype(attn_dtype).itemsize
    cap = _vmem_capacity_bytes()

    # Batch G heads per grid step when E < 128: lane-dense MXU/VPU tiles and
    # amortized (~0.35us) per-step pipeline overhead.
    G = _attn_head_group(H, E)
    bl = _choose_block_l(L, S, E, G, in_isz, attn_isz, budget=int(0.55 * cap))
    need = _attn_tile_bytes(G, bl, S, E, in_isz, attn_isz)

    kernel = functools.partial(_attn_kernel, scale=scale)
    cost = pl.CostEstimate(
        flops=int(4 * B * H * L * S * E),                  # QK^T + A@V
        transcendentals=int(B * H * L * S),                # exp
        bytes_accessed=int(in_isz * (q.size + k.size + v.size + B * H * L * E)
                           + attn_isz * B * H * L * S),
    )
    # TODO(synk): if S is not a multiple of 128 the attn writeback uses masked
    # partial stores; pad S in the caller for peak HBM write bandwidth.

    return pl.pallas_call(
        kernel,
        out_shape=(
            jax.ShapeDtypeStruct((B, H, L, E), q.dtype),
            jax.ShapeDtypeStruct((B, H, L, S), attn_dtype),
        ),
        grid=(B, H // G, pl.cdiv(L, bl)),
        in_specs=[
            pl.BlockSpec((1, G, bl, E), lambda b, hg, l: (b, hg, l, 0)),
            pl.BlockSpec((1, G, S, E), lambda b, hg, l: (b, hg, 0, 0)),
            pl.BlockSpec((1, G, S, E), lambda b, hg, l: (b, hg, 0, 0)),
        ],
        out_specs=(
            pl.BlockSpec((1, G, bl, E), lambda b, hg, l: (b, hg, l, 0)),
            pl.BlockSpec((1, G, bl, S), lambda b, hg, l: (b, hg, l, 0)),
        ),
        compiler_params=pltpu.CompilerParams(
            dimension_semantics=("parallel", "parallel", "parallel"),
            vmem_limit_bytes=_vmem_limit(need, cap)),
        cost_estimate=cost,
    )(q, k, v)


# ---------------------------------------------------------------------------
# Full module forward (n_heads / gemm_dtype are static under jit)
# ---------------------------------------------------------------------------
def self_attention_forward(params, queries, keys, values, attn_mask=None, *,
                           n_heads, gemm_dtype=None):
    # TODO(synk): attn_mask is not supported (the reference usage passes None).
    B, L, D = queries.shape
    H = n_heads
    E = D // H

    def cast(a):
        # Optional bf16 GEMM operands (f32 accumulation) for v6e/v7x MXUs.
        return a if gemm_dtype is None else a.astype(gemm_dtype)

    # Q/K/V projections write the (B, H, L, E) head-major layout directly
    # (layout transform fused into the projection kernel: no HBM transposes).
    qh = project_to_heads(cast(queries), cast(params["wq"]), params["bq"],
                          n_heads=H, head_dim=E, out_dtype=queries.dtype)
    kh = project_to_heads(cast(keys), cast(params["wk"]), params["bk"],
                          n_heads=H, head_dim=E, out_dtype=queries.dtype)
    vh = project_to_heads(cast(values), cast(params["wv"]), params["bv"],
                          n_heads=H, head_dim=E, out_dtype=queries.dtype)

    out_h, attn = multihead_attention(qh, kh, vh)       # (B,H,L,E), (B,H,L,S)

    # Output projection consumes the head-major layout directly and writes the
    # lane-dense (B, L, D) result.
    out = project_from_heads(cast(out_h), cast(params["wo"]), params["bo"],
                             out_dtype=queries.dtype)
    # TODO(synk): attention_dropout=0.1 is skipped (inference/eval semantics).
    # TODO(synk): K-dim (Din) tiling of the projection GEMMs for very large
    # d_model is not implemented; head-group / tn (Dout) tiling plus the
    # explicit vmem_limit covers typical widths.
    return out, attn


# ---------------------------------------------------------------------------
# Pure-JAX reference for verification
# ---------------------------------------------------------------------------
def reference_forward(params, queries, keys, values, *, n_heads):
    B, L, D = queries.shape
    _, S, _ = keys.shape
    H = n_heads
    E = D // H

    q = (queries @ params["wq"] + params["bq"]).reshape(B, L, H, E)
    k = (keys @ params["wk"] + params["bk"]).reshape(B, S, H, E)
    v = (values @ params["wv"] + params["bv"]).reshape(B, S, H, E)

    scores = jnp.einsum("blhe,bshe->bhls", q, k) / math.sqrt(E)
    attn = jax.nn.softmax(scores, axis=-1)
    out = jnp.einsum("bhls,bshe->blhe", attn, v).reshape(B, L, H * E)
    out = out @ params["wo"] + params["bo"]
    return out, attn


def init_params(key, d_model):
    ks = jax.random.split(key, 8)
    scale = 1.0 / math.sqrt(d_model)

    def lin(kw, kb, din, dout):
        w = jax.random.uniform(kw, (din, dout), jnp.float32, -scale, scale)
        b = jax.random.uniform(kb, (dout,), jnp.float32, -scale, scale)
        return w, b

    wq, bq = lin(ks[0], ks[1], d_model, d_model)
    wk, bk = lin(ks[2], ks[3], d_model, d_model)
    wv, bv = lin(ks[4], ks[5], d_model, d_model)
    wo, bo = lin(ks[6], ks[7], d_model, d_model)
    return dict(wq=wq, bq=bq, wk=wk, bk=bk, wv=wv, bv=bv, wo=wo, bo=bo)


def _run_case(B, L, S, d_model, n_heads, seed):
    key = jax.random.PRNGKey(seed)
    kq, kk, kv, kp = jax.random.split(key, 4)
    queries = jax.random.normal(kq, (B, L, d_model), jnp.float32)
    keys = jax.random.normal(kk, (B, S, d_model), jnp.float32)
    values = jax.random.normal(kv, (B, S, d_model), jnp.float32)
    params = init_params(kp, d_model)

    fwd = jax.jit(self_attention_forward,
                  static_argnames=("n_heads", "gemm_dtype"))
    out, attn = fwd(params, queries, keys, values, n_heads=n_heads)
    out = jax.block_until_ready(out)
    attn = jax.block_until_ready(attn)

    out_ref, attn_ref = reference_forward(params, queries, keys, values,
                                          n_heads=n_heads)
    np.testing.assert_allclose(np.asarray(out), np.asarray(out_ref),
                               rtol=1e-2, atol=1e-3)
    np.testing.assert_allclose(np.asarray(attn), np.asarray(attn_ref),
                               rtol=1e-2, atol=1e-3)


if __name__ == "__main__":
    # Small toy shape (E = 8 < 128 -> full-H head batching).
    _run_case(B=2, L=8, S=8, d_model=32, n_heads=4, seed=0)
    # Exercise head-group = 2 (E = 64) and lane-dense attn stores (S = 128).
    _run_case(B=2, L=128, S=128, d_model=256, n_heads=4, seed=1)
    print("KERNEL_OK")
</pallas_src>

<mosaic_0001>
module attributes {stable_mosaic.version = 11 : i64} {
  func.func @_out_proj_kernel(%arg0: i32, %arg1: i32, %arg2: i32, %arg3: memref<1x4x8x8xf32, #tpu.memory_space<vmem>>, %arg4: memref<4x8x32xf32, #tpu.memory_space<vmem>>, %arg5: memref<1x32xf32, #tpu.memory_space<vmem>>, %arg6: memref<1x8x32xf32, #tpu.memory_space<vmem>>) attributes {dimension_semantics = [#tpu.dimension_semantics<parallel>, #tpu.dimension_semantics<parallel>, #tpu.dimension_semantics<parallel>], iteration_bounds = array<i64: 1, 2, 1>, scalar_prefetch = 0 : i64, scratch_operands = 0 : i64, tpu.core_type = #tpu.core_type<tc>, window_params = [{transform_indices = @transform_0, window_bounds = array<i64: 1, 4, 8, 8>}, {transform_indices = @transform_1, window_bounds = array<i64: 4, 8, 32>}, {transform_indices = @transform_2, window_bounds = array<i64: 1, 32>}, {transform_indices = @transform_3, window_bounds = array<i64: 1, 8, 32>}]} {
    %c0 = arith.constant 0 : index
    %c0_0 = arith.constant 0 : index
    %c0_1 = arith.constant 0 : index
    %c0_2 = arith.constant 0 : index
    %0 = vector.load %arg3[%c0, %c0_0, %c0_1, %c0_2] : memref<1x4x8x8xf32, #tpu.memory_space<vmem>>, vector<1x1x8x8xf32>
    %1 = vector.shape_cast %0 : vector<1x1x8x8xf32> to vector<8x8xf32>
    %c0_3 = arith.constant 0 : index
    %c0_4 = arith.constant 0 : index
    %c0_5 = arith.constant 0 : index
    %2 = vector.load %arg4[%c0_3, %c0_4, %c0_5] : memref<4x8x32xf32, #tpu.memory_space<vmem>>, vector<1x8x32xf32>
    %3 = vector.shape_cast %2 : vector<1x8x32xf32> to vector<8x32xf32>
    %cst = arith.constant dense<0.000000e+00> : vector<8x32xf32>
    %4 = tpu.matmul %1, %3, %cst {dimension_numbers = #tpu.dot_dimension_numbers<[1], [0], [0], [1], [0, 0, 1, 1], [], []>} : vector<8x8xf32>, vector<8x32xf32>, vector<8x32xf32> -> vector<8x32xf32>
    %c0_6 = arith.constant 0 : index
    %c1 = arith.constant 1 : index
    %c0_7 = arith.constant 0 : index
    %c0_8 = arith.constant 0 : index
    %5 = vector.load %arg3[%c0_6, %c1, %c0_7, %c0_8] : memref<1x4x8x8xf32, #tpu.memory_space<vmem>>, vector<1x1x8x8xf32>
    %6 = vector.shape_cast %5 : vector<1x1x8x8xf32> to vector<8x8xf32>
    %c1_9 = arith.constant 1 : index
    %c0_10 = arith.constant 0 : index
    %c0_11 = arith.constant 0 : index
    %7 = vector.load %arg4[%c1_9, %c0_10, %c0_11] : memref<4x8x32xf32, #tpu.memory_space<vmem>>, vector<1x8x32xf32>
    %8 = vector.shape_cast %7 : vector<1x8x32xf32> to vector<8x32xf32>
    %cst_12 = arith.constant dense<0.000000e+00> : vector<8x32xf32>
    %9 = tpu.matmul %6, %8, %cst_12 {dimension_numbers = #tpu.dot_dimension_numbers<[1], [0], [0], [1], [0, 0, 1, 1], [], []>} : vector<8x8xf32>, vector<8x32xf32>, vector<8x32xf32> -> vector<8x32xf32>
    %10 = arith.addf %4, %9 : vector<8x32xf32>
    %c0_13 = arith.constant 0 : index
    %c2 = arith.constant 2 : index
    %c0_14 = arith.constant 0 : index
    %c0_15 = arith.constant 0 : index
    %11 = vector.load %arg3[%c0_13, %c2, %c0_14, %c0_15] : memref<1x4x8x8xf32, #tpu.memory_space<vmem>>, vector<1x1x8x8xf32>
    %12 = vector.shape_cast %11 : vector<1x1x8x8xf32> to vector<8x8xf32>
    %c2_16 = arith.constant 2 : index
    %c0_17 = arith.constant 0 : index
    %c0_18 = arith.constant 0 : index
    %13 = vector.load %arg4[%c2_16, %c0_17, %c0_18] : memref<4x8x32xf32, #tpu.memory_space<vmem>>, vector<1x8x32xf32>
    %14 = vector.shape_cast %13 : vector<1x8x32xf32> to vector<8x32xf32>
    %cst_19 = arith.constant dense<0.000000e+00> : vector<8x32xf32>
    %15 = tpu.matmul %12, %14, %cst_19 {dimension_numbers = #tpu.dot_dimension_numbers<[1], [0], [0], [1], [0, 0, 1, 1], [], []>} : vector<8x8xf32>, vector<8x32xf32>, vector<8x32xf32> -> vector<8x32xf32>
    %16 = arith.addf %10, %15 : vector<8x32xf32>
    %c0_20 = arith.constant 0 : index
    %c3 = arith.constant 3 : index
    %c0_21 = arith.constant 0 : index
    %c0_22 = arith.constant 0 : index
    %17 = vector.load %arg3[%c0_20, %c3, %c0_21, %c0_22] : memref<1x4x8x8xf32, #tpu.memory_space<vmem>>, vector<1x1x8x8xf32>
    %18 = vector.shape_cast %17 : vector<1x1x8x8xf32> to vector<8x8xf32>
    %c3_23 = arith.constant 3 : index
    %c0_24 = arith.constant 0 : index
    %c0_25 = arith.constant 0 : index
    %19 = vector.load %arg4[%c3_23, %c0_24, %c0_25] : memref<4x8x32xf32, #tpu.memory_space<vmem>>, vector<1x8x32xf32>
    %20 = vector.shape_cast %19 : vector<1x8x32xf32> to vector<8x32xf32>
    %cst_26 = arith.constant dense<0.000000e+00> : vector<8x32xf32>
    %21 = tpu.matmul %18, %20, %cst_26 {dimension_numbers = #tpu.dot_dimension_numbers<[1], [0], [0], [1], [0, 0, 1, 1], [], []>} : vector<8x8xf32>, vector<8x32xf32>, vector<8x32xf32> -> vector<8x32xf32>
    %22 = arith.addf %16, %21 : vector<8x32xf32>
    %c0_27 = arith.constant 0 : index
    %c0_28 = arith.constant 0 : index
    %23 = vector.load %arg5[%c0_27, %c0_28] : memref<1x32xf32, #tpu.memory_space<vmem>>, vector<1x32xf32>
    %24 = vector.broadcast %23 : vector<1x32xf32> to vector<8x32xf32>
    %25 = arith.addf %22, %24 : vector<8x32xf32>
    %c0_29 = arith.constant 0 : index
    %c0_30 = arith.constant 0 : index
    %c0_31 = arith.constant 0 : index
    %26 = vector.load %arg6[%c0_29, %c0_30, %c0_31] : memref<1x8x32xf32, #tpu.memory_space<vmem>>, vector<1x8x32xf32>
    %27 = vector.shape_cast %26 : vector<1x8x32xf32> to vector<8x32xf32>
    %28 = vector.shape_cast %25 : vector<8x32xf32> to vector<1x8x32xf32>
    tpu.vector_store %arg6[%c0_29, %c0_30, %c0_31], %28 {strides = array<i32>} : memref<1x8x32xf32, #tpu.memory_space<vmem>>, vector<1x8x32xf32>,
    return
  }
  func.func @transform_0(%arg0: i32, %arg1: i32, %arg2: i32) -> (i32, i32, i32, i32) {
    %c0_i32 = arith.constant 0 : i32
    %c0_i32_0 = arith.constant 0 : i32
    %c0_i32_1 = arith.constant 0 : i32
    return %arg1, %c0_i32, %arg2, %c0_i32_0 : i32, i32, i32, i32
  }
  func.func @transform_1(%arg0: i32, %arg1: i32, %arg2: i32) -> (i32, i32, i32) {
    %c0_i32 = arith.constant 0 : i32
    %c0_i32_0 = arith.constant 0 : i32
    %c0_i32_1 = arith.constant 0 : i32
    return %c0_i32, %c0_i32_0, %arg0 : i32, i32, i32
  }
  func.func @transform_2(%arg0: i32, %arg1: i32, %arg2: i32) -> (i32, i32) {
    %c0_i32 = arith.constant 0 : i32
    %c0_i32_0 = arith.constant 0 : i32
    return %c0_i32, %arg0 : i32, i32
  }
  func.func @transform_3(%arg0: i32, %arg1: i32, %arg2: i32) -> (i32, i32, i32) {
    %c0_i32 = arith.constant 0 : i32
    return %arg1, %arg2, %arg0 : i32, i32, i32
  }
}

module attributes {stable_mosaic.version = 11 : i64} {
  func.func @_attn_kernel(%arg0: i32, %arg1: i32, %arg2: i32, %arg3: memref<1x4x8x8xf32, #tpu.memory_space<vmem>>, %arg4: memref<1x4x8x8xf32, #tpu.memory_space<vmem>>, %arg5: memref<1x4x8x8xf32, #tpu.memory_space<vmem>>, %arg6: memref<1x4x8x8xf32, #tpu.memory_space<vmem>>, %arg7: memref<1x4x8x8xf32, #tpu.memory_space<vmem>>) attributes {dimension_semantics = [#tpu.dimension_semantics<parallel>, #tpu.dimension_semantics<parallel>, #tpu.dimension_semantics<parallel>], iteration_bounds = array<i64: 2, 1, 1>, scalar_prefetch = 0 : i64, scratch_operands = 0 : i64, tpu.core_type = #tpu.core_type<tc>, window_params = [{transform_indices = @transform_0, window_bounds = array<i64: 1, 4, 8, 8>}, {transform_indices = @transform_1, window_bounds = array<i64: 1, 4, 8, 8>}, {transform_indices = @transform_2, window_bounds = array<i64: 1, 4, 8, 8>}, {transform_indices = @transform_3, window_bounds = array<i64: 1, 4, 8, 8>}, {transform_indices = @transform_4, window_bounds = array<i64: 1, 4, 8, 8>}]} {
    %c0 = arith.constant 0 : index
    %c0_0 = arith.constant 0 : index
    %c0_1 = arith.constant 0 : index
    %c0_2 = arith.constant 0 : index
    %0 = vector.load %arg3[%c0, %c0_0, %c0_1, %c0_2] : memref<1x4x8x8xf32, #tpu.memory_space<vmem>>, vector<1x4x8x8xf32>
    %1 = vector.shape_cast %0 : vector<1x4x8x8xf32> to vector<4x8x8xf32>
    %c0_3 = arith.constant 0 : index
    %c0_4 = arith.constant 0 : index
    %c0_5 = arith.constant 0 : index
    %c0_6 = arith.constant 0 : index
    %2 = vector.load %arg4[%c0_3, %c0_4, %c0_5, %c0_6] : memref<1x4x8x8xf32, #tpu.memory_space<vmem>>, vector<1x4x8x8xf32>
    %3 = vector.shape_cast %2 : vector<1x4x8x8xf32> to vector<4x8x8xf32>
    %c0_7 = arith.constant 0 : index
    %c0_8 = arith.constant 0 : index
    %c0_9 = arith.constant 0 : index
    %c0_10 = arith.constant 0 : index
    %4 = vector.load %arg5[%c0_7, %c0_8, %c0_9, %c0_10] : memref<1x4x8x8xf32, #tpu.memory_space<vmem>>, vector<1x4x8x8xf32>
    %5 = vector.shape_cast %4 : vector<1x4x8x8xf32> to vector<4x8x8xf32>
    %cst = arith.constant 0.353553385 : f32
    %6 = vector.broadcast %cst : f32 to vector<4x8x8xf32>
    %7 = arith.mulf %1, %6 : vector<4x8x8xf32>
    "tpu.trace_start"() <{level = 10 : i32, message = "gle,gse->gls"}> : () -> ()
    %cst_11 = arith.constant dense<0.000000e+00> : vector<4x8x8xf32>
    %8 = tpu.matmul %7, %3, %cst_11 {dimension_numbers = #tpu.dot_dimension_numbers<[2], [2], [1], [1], [0, 0, 0, 1, 1, 1], [0], [0]>} : vector<4x8x8xf32>, vector<4x8x8xf32>, vector<4x8x8xf32> -> vector<4x8x8xf32>
    "tpu.trace_stop"() : () -> ()
    %cst_12 = arith.constant dense<0xFF800000> : vector<4x8xf32>
    %9 = vector.multi_reduction <maximumf>, %8, %cst_12 [2] : vector<4x8x8xf32> to vector<4x8xf32>
    %10 = vector.shape_cast %9 : vector<4x8xf32> to vector<4x8x1xf32>
    %11 = vector.broadcast %10 : vector<4x8x1xf32> to vector<4x8x8xf32>
    %12 = arith.subf %8, %11 : vector<4x8x8xf32>
    %13 = math.exp %12 : vector<4x8x8xf32>
    %cst_13 = arith.constant dense<0.000000e+00> : vector<4x8xf32>
    %14 = vector.multi_reduction <add>, %13, %cst_13 [2] : vector<4x8x8xf32> to vector<4x8xf32>
    %15 = vector.shape_cast %14 : vector<4x8xf32> to vector<4x8x1xf32>
    %16 = vector.broadcast %15 : vector<4x8x1xf32> to vector<4x8x8xf32>
    %17 = arith.divf %13, %16 : vector<4x8x8xf32>
    "tpu.trace_start"() <{level = 10 : i32, message = "gls,gse->gle"}> : () -> ()
    %cst_14 = arith.constant dense<0.000000e+00> : vector<4x8x8xf32>
    %18 = tpu.matmul %17, %5, %cst_14 {dimension_numbers = #tpu.dot_dimension_numbers<[2], [1], [1], [2], [0, 0, 0, 1, 1, 2], [0], [0]>} : vector<4x8x8xf32>, vector<4x8x8xf32>, vector<4x8x8xf32> -> vector<4x8x8xf32>
    "tpu.trace_stop"() : () -> ()
    %c0_15 = arith.constant 0 : index
    %c0_16 = arith.constant 0 : index
    %c0_17 = arith.constant 0 : index
    %c0_18 = arith.constant 0 : index
    %19 = vector.load %arg7[%c0_15, %c0_16, %c0_17, %c0_18] : memref<1x4x8x8xf32, #tpu.memory_space<vmem>>, vector<1x4x8x8xf32>
    %20 = vector.shape_cast %19 : vector<1x4x8x8xf32> to vector<4x8x8xf32>
    %21 = vector.shape_cast %17 : vector<4x8x8xf32> to vector<1x4x8x8xf32>
    tpu.vector_store %arg7[%c0_15, %c0_16, %c0_17, %c0_18], %21 {strides = array<i32>} : memref<1x4x8x8xf32, #tpu.memory_space<vmem>>, vector<1x4x8x8xf32>,
    %c0_19 = arith.constant 0 : index
    %c0_20 = arith.constant 0 : index
    %c0_21 = arith.constant 0 : index
    %c0_22 = arith.constant 0 : index
    %22 = vector.load %arg6[%c0_19, %c0_20, %c0_21, %c0_22] : memref<1x4x8x8xf32, #tpu.memory_space<vmem>>, vector<1x4x8x8xf32>
    %23 = vector.shape_cast %22 : vector<1x4x8x8xf32> to vector<4x8x8xf32>
    %24 = vector.shape_cast %18 : vector<4x8x8xf32> to vector<1x4x8x8xf32>
    tpu.vector_store %arg6[%c0_19, %c0_20, %c0_21, %c0_22], %24 {strides = array<i32>} : memref<1x4x8x8xf32, #tpu.memory_space<vmem>>, vector<1x4x8x8xf32>,
    return
  }
  func.func @transform_0(%arg0: i32, %arg1: i32, %arg2: i32) -> (i32, i32, i32, i32) {
    %c0_i32 = arith.constant 0 : i32
    %c0_i32_0 = arith.constant 0 : i32
    return %arg0, %arg1, %arg2, %c0_i32 : i32, i32, i32, i32
  }
  func.func @transform_1(%arg0: i32, %arg1: i32, %arg2: i32) -> (i32, i32, i32, i32) {
    %c0_i32 = arith.constant 0 : i32
    %c0_i32_0 = arith.constant 0 : i32
    %c0_i32_1 = arith.constant 0 : i32
    return %arg0, %arg1, %c0_i32, %c0_i32_0 : i32, i32, i32, i32
  }
  func.func @transform_2(%arg0: i32, %arg1: i32, %arg2: i32) -> (i32, i32, i32, i32) {
    %c0_i32 = arith.constant 0 : i32
    %c0_i32_0 = arith.constant 0 : i32
    %c0_i32_1 = arith.constant 0 : i32
    return %arg0, %arg1, %c0_i32, %c0_i32_0 : i32, i32, i32, i32
  }
  func.func @transform_3(%arg0: i32, %arg1: i32, %arg2: i32) -> (i32, i32, i32, i32) {
    %c0_i32 = arith.constant 0 : i32
    %c0_i32_0 = arith.constant 0 : i32
    return %arg0, %arg1, %arg2, %c0_i32 : i32, i32, i32, i32
  }
  func.func @transform_4(%arg0: i32, %arg1: i32, %arg2: i32) -> (i32, i32, i32, i32) {
    %c0_i32 = arith.constant 0 : i32
    %c0_i32_0 = arith.constant 0 : i32
    return %arg0, %arg1, %arg2, %c0_i32 : i32, i32, i32, i32
  }
}

module attributes {stable_mosaic.version = 11 : i64} {
  func.func @_qkv_proj_kernel(%arg0: i32, %arg1: i32, %arg2: i32, %arg3: memref<1x8x32xf32, #tpu.memory_space<vmem>>, %arg4: memref<32x32xf32, #tpu.memory_space<vmem>>, %arg5: memref<1x32xf32, #tpu.memory_space<vmem>>, %arg6: memref<1x4x8x8xf32, #tpu.memory_space<vmem>>) attributes {dimension_semantics = [#tpu.dimension_semantics<parallel>, #tpu.dimension_semantics<parallel>, #tpu.dimension_semantics<parallel>], iteration_bounds = array<i64: 1, 2, 1>, scalar_prefetch = 0 : i64, scratch_operands = 0 : i64, tpu.core_type = #tpu.core_type<tc>, window_params = [{transform_indices = @transform_0, window_bounds = array<i64: 1, 8, 32>}, {transform_indices = @transform_1, window_bounds = array<i64: 32, 32>}, {transform_indices = @transform_2, window_bounds = array<i64: 1, 32>}, {transform_indices = @transform_3, window_bounds = array<i64: 1, 4, 8, 8>}]} {
    %c0 = arith.constant 0 : index
    %c0_0 = arith.constant 0 : index
    %c0_1 = arith.constant 0 : index
    %0 = vector.load %arg3[%c0, %c0_0, %c0_1] : memref<1x8x32xf32, #tpu.memory_space<vmem>>, vector<1x8x32xf32>
    %1 = vector.shape_cast %0 : vector<1x8x32xf32> to vector<8x32xf32>
    %c0_2 = arith.constant 0 : index
    %c0_3 = arith.constant 0 : index
    %2 = vector.load %arg4[%c0_2, %c0_3] : memref<32x32xf32, #tpu.memory_space<vmem>>, vector<32x32xf32>
    %cst = arith.constant dense<0.000000e+00> : vector<8x32xf32>
    %3 = tpu.matmul %1, %2, %cst {dimension_numbers = #tpu.dot_dimension_numbers<[1], [0], [0], [1], [0, 0, 1, 1], [], []>} : vector<8x32xf32>, vector<32x32xf32>, vector<8x32xf32> -> vector<8x32xf32>
    %c0_4 = arith.constant 0 : index
    %c0_5 = arith.constant 0 : index
    %4 = vector.load %arg5[%c0_4, %c0_5] : memref<1x32xf32, #tpu.memory_space<vmem>>, vector<1x32xf32>
    %5 = vector.broadcast %4 : vector<1x32xf32> to vector<8x32xf32>
    %6 = arith.addf %3, %5 : vector<8x32xf32>
    %7 = vector.extract_strided_slice %6 {offsets = [0, 0], sizes = [8, 8], strides = [1, 1]} : vector<8x32xf32> to vector<8x8xf32>
    %c0_6 = arith.constant 0 : index
    %c0_7 = arith.constant 0 : index
    %c0_8 = arith.constant 0 : index
    %c0_9 = arith.constant 0 : index
    %8 = vector.load %arg6[%c0_6, %c0_7, %c0_8, %c0_9] : memref<1x4x8x8xf32, #tpu.memory_space<vmem>>, vector<1x1x8x8xf32>
    %9 = vector.shape_cast %8 : vector<1x1x8x8xf32> to vector<8x8xf32>
    %10 = vector.shape_cast %7 : vector<8x8xf32> to vector<1x1x8x8xf32>
    tpu.vector_store %arg6[%c0_6, %c0_7, %c0_8, %c0_9], %10 {strides = array<i32>} : memref<1x4x8x8xf32, #tpu.memory_space<vmem>>, vector<1x1x8x8xf32>,
    %11 = vector.extract_strided_slice %6 {offsets = [0, 8], sizes = [8, 8], strides = [1, 1]} : vector<8x32xf32> to vector<8x8xf32>
    %c0_10 = arith.constant 0 : index
    %c1 = arith.constant 1 : index
    %c0_11 = arith.constant 0 : index
    %c0_12 = arith.constant 0 : index
    %12 = vector.load %arg6[%c0_10, %c1, %c0_11, %c0_12] : memref<1x4x8x8xf32, #tpu.memory_space<vmem>>, vector<1x1x8x8xf32>
    %13 = vector.shape_cast %12 : vector<1x1x8x8xf32> to vector<8x8xf32>
    %14 = vector.shape_cast %11 : vector<8x8xf32> to vector<1x1x8x8xf32>
    tpu.vector_store %arg6[%c0_10, %c1, %c0_11, %c0_12], %14 {strides = array<i32>} : memref<1x4x8x8xf32, #tpu.memory_space<vmem>>, vector<1x1x8x8xf32>,
    %15 = vector.extract_strided_slice %6 {offsets = [0, 16], sizes = [8, 8], strides = [1, 1]} : vector<8x32xf32> to vector<8x8xf32>
    %c0_13 = arith.constant 0 : index
    %c2 = arith.constant 2 : index
    %c0_14 = arith.constant 0 : index
    %c0_15 = arith.constant 0 : index
    %16 = vector.load %arg6[%c0_13, %c2, %c0_14, %c0_15] : memref<1x4x8x8xf32, #tpu.memory_space<vmem>>, vector<1x1x8x8xf32>
    %17 = vector.shape_cast %16 : vector<1x1x8x8xf32> to vector<8x8xf32>
    %18 = vector.shape_cast %15 : vector<8x8xf32> to vector<1x1x8x8xf32>
    tpu.vector_store %arg6[%c0_13, %c2, %c0_14, %c0_15], %18 {strides = array<i32>} : memref<1x4x8x8xf32, #tpu.memory_space<vmem>>, vector<1x1x8x8xf32>,
    %19 = vector.extract_strided_slice %6 {offsets = [0, 24], sizes = [8, 8], strides = [1, 1]} : vector<8x32xf32> to vector<8x8xf32>
    %c0_16 = arith.constant 0 : index
    %c3 = arith.constant 3 : index
    %c0_17 = arith.constant 0 : index
    %c0_18 = arith.constant 0 : index
    %20 = vector.load %arg6[%c0_16, %c3, %c0_17, %c0_18] : memref<1x4x8x8xf32, #tpu.memory_space<vmem>>, vector<1x1x8x8xf32>
    %21 = vector.shape_cast %20 : vector<1x1x8x8xf32> to vector<8x8xf32>
    %22 = vector.shape_cast %19 : vector<8x8xf32> to vector<1x1x8x8xf32>
    tpu.vector_store %arg6[%c0_16, %c3, %c0_17, %c0_18], %22 {strides = array<i32>} : memref<1x4x8x8xf32, #tpu.memory_space<vmem>>, vector<1x1x8x8xf32>,
    return
  }
  func.func @transform_0(%arg0: i32, %arg1: i32, %arg2: i32) -> (i32, i32, i32) {
    %c0_i32 = arith.constant 0 : i32
    %c0_i32_0 = arith.constant 0 : i32
    return %arg1, %arg2, %c0_i32 : i32, i32, i32
  }
  func.func @transform_1(%arg0: i32, %arg1: i32, %arg2: i32) -> (i32, i32) {
    %c0_i32 = arith.constant 0 : i32
    %c0_i32_0 = arith.constant 0 : i32
    return %c0_i32, %arg0 : i32, i32
  }
  func.func @transform_2(%arg0: i32, %arg1: i32, %arg2: i32) -> (i32, i32) {
    %c0_i32 = arith.constant 0 : i32
    %c0_i32_0 = arith.constant 0 : i32
    return %c0_i32, %arg0 : i32, i32
  }
  func.func @transform_3(%arg0: i32, %arg1: i32, %arg2: i32) -> (i32, i32, i32, i32) {
    %c0_i32 = arith.constant 0 : i32
    %c0_i32_0 = arith.constant 0 : i32
    return %arg1, %arg0, %arg2, %c0_i32 : i32, i32, i32, i32
  }
}

</mosaic_0001>

<llo_original>
// kernel: self_attention_forward.8
$region0: #{self_attention_forward.8}
  #allocation0 [shape = 'u32[]', space=smem, size = 0x4, offset = 0x4, fixed_abs, tag = 'smem constant byte address 0x4 - core index']
  #allocation1 [shape = 'u32[72,128]{1,0:T(1,128)}', space=vmem, size = 0x9000, scoped, tag = 'internal scratch']
  %s0 = inlined_call_operand.vmem [shape: f32[2,4,8,8], index: 0, kind: input, shape index: {}]
  %s1 = inlined_call_operand.vmem [shape: f32[2,4,8,8], index: 1, kind: input, shape index: {}]
  %s2 = inlined_call_operand.vmem [shape: f32[2,4,8,8], index: 2, kind: input, shape index: {}]
  %s3 = inlined_call_operand.vmem [shape: f32[2,4,8,8], index: 3, kind: output, shape index: {0}]
  %s4 = inlined_call_operand.hbm [shape: f32[2,4,8,8], index: 4, kind: output, shape index: {1}]
  %5 = xla_tuple %s3, %s4
  %s6 = sld [smem:[#allocation0]]
  $region53: #{self_attention_forward.8} parent=0
    _
  %s8 = ssub.s32 1, %s6
  %s9 = scalar_select 0, %s8, %s6
  $region1: #{self_attention_forward.8} parent=0
    #allocation2 [shape = 'u8[32768]{0}', space=vmem, size = 0x8000, scoped, tag = 'output window, operand 1']
    #allocation3 [shape = 's32[2]{0}', space=sflag, size = 0x8, scoped, tag = 'scoped memory for self_attention_forward.8']
    %10 = vsyncpa [#allocation3], 0
    %s11 = scalar_lea.sflag [#allocation3], 1
    %12 = vsyncpa %s11, 0
    loop: start=0, step=1, limit=4
    $region2: #{self_attention_forward.8} parent=1 // loop_pre_header
      _
    $region3: #{self_attention_forward.8} parent=1 // loop_header
      %s14 = sphi 0, %s18
      %p15 = scmp.ge.s32.totalorder %s14, 4
      %s21 = sphi 0, %s40
      %s22 = sphi 0, %s36
      %s23 = sphi 0, %s32
      %s24 = sphi 0, %s21
      %s25 = sphi 0, %s22
      %s26 = sphi 0, %s23
      %s27 = sphi 0, %s24
      %s28 = sphi 0, %s25
      %s29 = sphi 0, %s26
      %s47 = sphi 0, %s49
      %s50 = sphi 0, %s47
      %s51 = sphi 0, %s50
      %s67 = sphi 0, %s51
      %s75 = sphi 0, %s77
      %s78 = sphi 0, %s75
      %s79 = sphi 0, %s78
      %s95 = sphi 0, %s79
      %s103 = sphi 0, %s105
      %s106 = sphi 0, %s103
      %s107 = sphi 0, %s106
      %s123 = sphi 0, %s107
      %s133 = sphi 0, %s135
      %s136 = sphi 0, %s133
      %s137 = sphi 0, %s136
      %s153 = sphi 0, %s137
      %s163 = sphi 0, %s165
      %s166 = sphi 0, %s163
      %s167 = sphi 0, %s166
      %s183 = sphi 0, %s167
    $region4: #{self_attention_forward.8} parent=1 // loop_header_branch
      %17 = sbr.rel (%p15) target = $region8
    $region5: #{self_attention_forward.8} parent=1 // loop_body
      %s19 = ssub.s32 %s14, 1
      %s20 = ssub.s32 %s14, 2
      %s30 = sadd.s32 1, %s23
      %p31 = scmp.ge.s32.totalorder %s30, 1
      %s32 = scalar_select %p31, 0, %s30
      %s33 = sadd.s32 1, %s22
      %s34 = scalar_select %p31, %s33, %s22
      %p35 = scmp.ge.s32.totalorder %s34, 1
      %s36 = scalar_select %p35, 0, %s34
      %s37 = sadd.s32 1, %s21
      %s38 = scalar_select %p35, %s37, %s21
      %p39 = scmp.ge.s32.totalorder %s38, 2
      %s40 = scalar_select %p39, 0, %s38
      %s41 = ssub.s32 %s21, %s40
      %s42 = ssub.s32 %s22, %s36
      %s43 = sor.u32 %s41, %s42
      %s44 = ssub.s32 %s23, %s32
      %s45 = sor.u32 %s43, %s44
      %p46 = scmp.eq.s32.totalorder %s45, 0
      %s48 = sadd.s32 %s47, 1
      %s49 = scalar_select %p46, %s47, %s48
      %p52 = pneg %p46
      %p53 = scmp.eq.s32.totalorder %s14, 1
      %p54 = por %p52, %p53
      %p55 = scmp.ne.s32.totalorder %s47, %s50
      %p56 = scmp.eq.s32.totalorder %s14, 0
      %p57 = por %p55, %p56
      %p58 = scmp.ne.s32.totalorder %s47, %s50
      %p59 = scmp.eq.s32.totalorder %s19, 1
      %p60 = por %p58, %p59
      %p61 = scmp.ne.s32.totalorder %s50, %s51
      %p62 = scmp.eq.s32.totalorder %s19, 0
      %p63 = por %p61, %p62
      %p64 = scmp.ne.s32.totalorder %s50, %s51
      %p65 = scmp.eq.s32.totalorder %s20, 1
      %p66 = por %p64, %p65
      %p68 = scmp.ne.s32.totalorder %s51, %s67
      %p69 = scmp.eq.s32.totalorder %s20, 0
      %p70 = por %p68, %p69
      %s71 = ssub.s32 %s21, %s40
      %s72 = ssub.s32 %s22, %s36
      %s73 = sor.u32 %s71, %s72
      %p74 = scmp.eq.s32.totalorder %s73, 0
      %s76 = sadd.s32 %s75, 1
      %s77 = scalar_select %p74, %s75, %s76
      %p80 = pneg %p74
      %p81 = scmp.eq.s32.totalorder %s14, 1
      %p82 = por %p80, %p81
      %p83 = scmp.ne.s32.totalorder %s75, %s78
      %p84 = scmp.eq.s32.totalorder %s14, 0
      %p85 = por %p83, %p84
      %p86 = scmp.ne.s32.totalorder %s75, %s78
      %p87 = scmp.eq.s32.totalorder %s19, 1
      %p88 = por %p86, %p87
      %p89 = scmp.ne.s32.totalorder %s78, %s79
      %p90 = scmp.eq.s32.totalorder %s19, 0
      %p91 = por %p89, %p90
      %p92 = scmp.ne.s32.totalorder %s78, %s79
      %p93 = scmp.eq.s32.totalorder %s20, 1
      %p94 = por %p92, %p93
      %p96 = scmp.ne.s32.totalorder %s79, %s95
      %p97 = scmp.eq.s32.totalorder %s20, 0
      %p98 = por %p96, %p97
      %s99 = ssub.s32 %s21, %s40
      %s100 = ssub.s32 %s22, %s36
      %s101 = sor.u32 %s99, %s100
      %p102 = scmp.eq.s32.totalorder %s101, 0
      %s104 = sadd.s32 %s103, 1
      %s105 = scalar_select %p102, %s103, %s104
      %p108 = pneg %p102
      %p109 = scmp.eq.s32.totalorder %s14, 1
      %p110 = por %p108, %p109
      %p111 = scmp.ne.s32.totalorder %s103, %s106
      %p112 = scmp.eq.s32.totalorder %s14, 0
      %p113 = por %p111, %p112
      %p114 = scmp.ne.s32.totalorder %s103, %s106
      %p115 = scmp.eq.s32.totalorder %s19, 1
      %p116 = por %p114, %p115
      %p117 = scmp.ne.s32.totalorder %s106, %s107
      %p118 = scmp.eq.s32.totalorder %s19, 0
      %p119 = por %p117, %p118
      %p120 = scmp.ne.s32.totalorder %s106, %s107
      %p121 = scmp.eq.s32.totalorder %s20, 1
      %p122 = por %p120, %p121
      %p124 = scmp.ne.s32.totalorder %s107, %s123
      %p125 = scmp.eq.s32.totalorder %s20, 0
      %p126 = por %p124, %p125
      %s127 = ssub.s32 %s21, %s40
      %s128 = ssub.s32 %s22, %s36
      %s129 = sor.u32 %s127, %s128
      %s130 = ssub.s32 %s23, %s32
      %s131 = sor.u32 %s129, %s130
      %p132 = scmp.eq.s32.totalorder %s131, 0
      %s134 = sadd.s32 %s133, 1
      %s135 = scalar_select %p132, %s133, %s134
      %p138 = pneg %p132
      %p139 = scmp.eq.s32.totalorder %s14, 1
      %p140 = por %p138, %p139
      %p141 = scmp.ne.s32.totalorder %s133, %s136
      %p142 = scmp.eq.s32.totalorder %s14, 0
      %p143 = por %p141, %p142
      %p144 = scmp.ne.s32.totalorder %s133, %s136
      %p145 = scmp.eq.s32.totalorder %s19, 1
      %p146 = por %p144, %p145
      %p147 = scmp.ne.s32.totalorder %s136, %s137
      %p148 = scmp.eq.s32.totalorder %s19, 0
      %p149 = por %p147, %p148
      %p150 = scmp.ne.s32.totalorder %s136, %s137
      %p151 = scmp.eq.s32.totalorder %s20, 1
      %p152 = por %p150, %p151
      %p154 = scmp.ne.s32.totalorder %s137, %s153
      %p155 = scmp.eq.s32.totalorder %s20, 0
      %p156 = por %p154, %p155
      %s157 = ssub.s32 %s21, %s40
      %s158 = ssub.s32 %s22, %s36
      %s159 = sor.u32 %s157, %s158
      %s160 = ssub.s32 %s23, %s32
      %s161 = sor.u32 %s159, %s160
      %p162 = scmp.eq.s32.totalorder %s161, 0
      %s164 = sadd.s32 %s163, 1
      %s165 = scalar_select %p162, %s163, %s164
      %p168 = pneg %p162
      %p169 = scmp.eq.s32.totalorder %s14, 1
      %p170 = por %p168, %p169
      %p171 = scmp.ne.s32.totalorder %s163, %s166
      %p172 = scmp.eq.s32.totalorder %s14, 0
      %p173 = por %p171, %p172
      %p174 = scmp.ne.s32.totalorder %s163, %s166
      %p175 = scmp.eq.s32.totalorder %s19, 1
      %p176 = por %p174, %p175
      %p177 = scmp.ne.s32.totalorder %s166, %s167
      %p178 = scmp.eq.s32.totalorder %s19, 0
      %p179 = por %p177, %p178
      %p180 = scmp.ne.s32.totalorder %s166, %s167
      %p181 = scmp.eq.s32.totalorder %s20, 1
      %p182 = por %p180, %p181
      %p184 = scmp.ne.s32.totalorder %s167, %s183
      %p185 = scmp.eq.s32.totalorder %s20, 0
      %p186 = por %p184, %p185
      %p187 = scmp.le.s32.totalorder 1, %s14
      %p188 = scmp.lt.s32.totalorder %s14, 3
      %p189 = pnand %p187, %p188
      %p190 = pneg %p189
      // Predicated region
      $region9: #{self_attention_forward.8} parent=5 // pred_check
        _
      $region10: #{self_attention_forward.8} parent=5 // pred_check_branch
        %192 = sbr.rel (%p189) target = $region12
      $region11: #{self_attention_forward.8} parent=5 // pred_region
        %s193 = ssub.s32 %s14, 1
      $region12: #{self_attention_forward.8} parent=5 // pred_fallthru
        _
      %p194 = scmp.lt.s32.totalorder %s14, 2
      // Predicated region
      $region13: #{self_attention_forward.8} parent=5 // pred_check
        %p195 = pneg %p194
      $region14: #{self_attention_forward.8} parent=5 // pred_check_branch
        %197 = sbr.rel (%p195) target = $region16
      $region15: #{self_attention_forward.8} parent=5 // pred_region
        // Predicated region
        $region17: #{self_attention_forward.8} parent=15 // pred_check
          %p198 = pneg %p57
        $region18: #{self_attention_forward.8} parent=15 // pred_check_branch
          %200 = sbr.rel (%p198) target = $region20
        $region19: #{self_attention_forward.8} parent=15 // pred_region
          %s201 = smul.u32 4, %s22
          %p202 = scmp.lt.s32.totalorder %s21, 1
          %s203 = scalar_select %p202, %s21, 1
          %p204 = scmp.lt.s32.totalorder %s201, 3
          %s205 = scalar_select %p204, %s201, 3
          %p206 = scmp.lt.s32.totalorder %s23, 0
          %s207 = scalar_select %p206, %s23, 0
          %s208 = sadd.s32 %s207, %s205
          %s209 = smul.addr %s203, 4
          %s210 = sadd.s32 %s208, %s209
          %s211 = smul.addr %s210, 8
          %s212 = scalar_lea.vmem %s0, %s211
          %s213 = smul.u32 4, %s22
        $region20: #{self_attention_forward.8} parent=15 // pred_fallthru
          _
        // Predicated region
        $region21: #{self_attention_forward.8} parent=15 // pred_check
          %p214 = pneg %p85
        $region22: #{self_attention_forward.8} parent=15 // pred_check_branch
          %216 = sbr.rel (%p214) target = $region24
        $region23: #{self_attention_forward.8} parent=15 // pred_region
          %s217 = smul.u32 4, %s22
          %p218 = scmp.lt.s32.totalorder %s21, 1
          %s219 = scalar_select %p218, %s21, 1
          %p220 = scmp.lt.s32.totalorder %s217, 3
          %s221 = scalar_select %p220, %s217, 3
          %s222 = smul.addr %s219, 4
          %s223 = sadd.s32 %s221, %s222
          %s224 = smul.addr %s223, 8
          %s225 = scalar_lea.vmem %s1, %s224
          %s226 = smul.u32 4, %s22
        $region24: #{self_attention_forward.8} parent=15 // pred_fallthru
          _
        // Predicated region
        $region25: #{self_attention_forward.8} parent=15 // pred_check
          %p227 = pneg %p113
        $region26: #{self_attention_forward.8} parent=15 // pred_check_branch
          %229 = sbr.rel (%p227) target = $region28
        $region27: #{self_attention_forward.8} parent=15 // pred_region
          %s230 = smul.u32 4, %s22
          %p231 = scmp.lt.s32.totalorder %s21, 1
          %s232 = scalar_select %p231, %s21, 1
          %p233 = scmp.lt.s32.totalorder %s230, 3
          %s234 = scalar_select %p233, %s230, 3
          %s235 = smul.addr %s232, 4
          %s236 = sadd.s32 %s234, %s235
          %s237 = smul.addr %s236, 8
          %s238 = scalar_lea.vmem %s2, %s237
          %s239 = smul.u32 4, %s22
        $region28: #{self_attention_forward.8} parent=15 // pred_fallthru
          _
      $region16: #{self_attention_forward.8} parent=5 // pred_fallthru
        _
      %p240 = scmp.le.s32.totalorder 1, %s14
      %p241 = scmp.lt.s32.totalorder %s14, 3
      %p242 = pnand %p240, %p241
      %p243 = pneg %p242
      // Predicated region
      $region29: #{self_attention_forward.8} parent=5 // pred_check
        _
      $region30: #{self_attention_forward.8} parent=5 // pred_check_branch
        %245 = sbr.rel (%p242) target = $region32
      $region31: #{self_attention_forward.8} parent=5 // pred_region
        %s246 = ssub.s32 %s14, 1
        %s247 = smul.u32 4, %s25
        %p248 = scmp.lt.s32.totalorder %s24, 1
        %s249 = scalar_select %p248, %s24, 1
        %p250 = scmp.lt.s32.totalorder %s247, 3
        %s251 = scalar_select %p250, %s247, 3
        %p252 = scmp.lt.s32.totalorder %s26, 0
        %s253 = scalar_select %p252, %s26, 0
        %s254 = sadd.s32 %s253, %s251
        %s255 = smul.addr %s249, 4
        %s256 = sadd.s32 %s254, %s255
        %s257 = smul.addr %s256, 8
        %s258 = scalar_lea.vmem %s0, %s257
        %p259 = pneg %p63
        %p260 = pneg %p60
        %s261 = smul.u32 4, %s25
        %p262 = scmp.lt.s32.totalorder %s24, 1
        %s263 = scalar_select %p262, %s24, 1
        %p264 = scmp.lt.s32.totalorder %s261, 3
        %s265 = scalar_select %p264, %s261, 3
        %s266 = smul.addr %s263, 4
        %s267 = sadd.s32 %s265, %s266
        %s268 = smul.addr %s267, 8
        %s269 = scalar_lea.vmem %s1, %s268
        %p270 = pneg %p91
        %p271 = pneg %p88
        %s272 = smul.u32 4, %s25
        %p273 = scmp.lt.s32.totalorder %s24, 1
        %s274 = scalar_select %p273, %s24, 1
        %p275 = scmp.lt.s32.totalorder %s272, 3
        %s276 = scalar_select %p275, %s272, 3
        %s277 = smul.addr %s274, 4
        %s278 = sadd.s32 %s276, %s277
        %s279 = smul.addr %s278, 8
        %s280 = scalar_lea.vmem %s2, %s279
        %p281 = pneg %p119
        %p282 = pneg %p116
        %p283 = pneg %p149
        %p284 = pneg %p146
        %s285 = smul.u32 4, %s25
        %p286 = scmp.lt.s32.totalorder %s24, 1
        %s287 = scalar_select %p286, %s24, 1
        %p288 = scmp.lt.s32.totalorder %s285, 3
        %s289 = scalar_select %p288, %s285, 3
        %p290 = scmp.lt.s32.totalorder %s26, 0
        %s291 = scalar_select %p290, %s26, 0
        %s292 = sadd.s32 %s291, %s289
        %s293 = smul.addr %s287, 4
        %s294 = sadd.s32 %s292, %s293
        %s295 = smul.addr %s294, 8
        %s296 = scalar_lea.vmem %s3, %s295
        %p297 = pneg %p179
        %p298 = pneg %p176
        %s299 = sand.u32 %s166, 1
        %s300 = scalar_lea.sflag [#allocation3], %s299
        %s301 = sand.u32 %s166, 1
        %s302 = smul.addr %s301, 32
        %s303 = scalar_lea.vmem [#allocation2], %s302
        %s304 = smul.u32 4, %s25
        %p305 = scmp.lt.s32.totalorder %s24, 1
        %s306 = scalar_select %p305, %s24, 1
        %p307 = scmp.lt.s32.totalorder %s304, 3
        %s308 = scalar_select %p307, %s304, 3
        %p309 = scmp.lt.s32.totalorder %s26, 0
        %s310 = scalar_select %p309, %s26, 0
        %s311 = sadd.s32 %s310, %s308
        %s312 = smul.addr %s306, 4
        %s313 = sadd.s32 %s311, %s312
        %s314 = smul.addr %s313, 8
        %s315 = scalar_lea.vmem %s0, %s314
        %s316 = smul.u32 4, %s25
        %s317 = smul.u32 4, %s25
        %p318 = scmp.lt.s32.totalorder %s24, 1
        %s319 = scalar_select %p318, %s24, 1
        %p320 = scmp.lt.s32.totalorder %s317, 3
        %s321 = scalar_select %p320, %s317, 3
        %s322 = smul.addr %s319, 4
        %s323 = sadd.s32 %s321, %s322
        %s324 = smul.addr %s323, 8
        %s325 = scalar_lea.vmem %s1, %s324
        %s326 = smul.u32 4, %s25
        %s327 = smul.u32 4, %s25
        %p328 = scmp.lt.s32.totalorder %s24, 1
        %s329 = scalar_select %p328, %s24, 1
        %p330 = scmp.lt.s32.totalorder %s327, 3
        %s331 = scalar_select %p330, %s327, 3
        %s332 = smul.addr %s329, 4
        %s333 = sadd.s32 %s331, %s332
        %s334 = smul.addr %s333, 8
        %s335 = scalar_lea.vmem %s2, %s334
        %s336 = smul.u32 4, %s25
        %s337 = smul.u32 4, %s25
        %p338 = scmp.lt.s32.totalorder %s24, 1
        %s339 = scalar_select %p338, %s24, 1
        %p340 = scmp.lt.s32.totalorder %s337, 3
        %s341 = scalar_select %p340, %s337, 3
        %p342 = scmp.lt.s32.totalorder %s26, 0
        %s343 = scalar_select %p342, %s26, 0
        %s344 = sadd.s32 %s343, %s341
        %s345 = smul.addr %s339, 4
        %s346 = sadd.s32 %s344, %s345
        %s347 = smul.addr %s346, 8
        %s348 = scalar_lea.vmem %s3, %s347
        %s349 = smul.u32 4, %s25
        %s350 = smul.u32 4, %s25
        %v351 = vld [vmem:[%s315] sm:$0xff]
        %v352 = vld [vmem:[%s315 + $0x8] sm:$0xff]
        %v353 = vld [vmem:[%s315 + $0x10] sm:$0xff]
        %v354 = vld [vmem:[%s315 + $0x18] sm:$0xff]
        %v355 = vld [vmem:[%s325] sm:$0xff]
        %v356 = vld [vmem:[%s325 + $0x8] sm:$0xff]
        %v357 = vld [vmem:[%s325 + $0x10] sm:$0xff]
        %v358 = vld [vmem:[%s325 + $0x18] sm:$0xff]
        %v359 = vld [vmem:[%s335] sm:$0xff]
        %v360 = vld [vmem:[%s335 + $0x8] sm:$0xff]
        %v361 = vld [vmem:[%s335 + $0x10] sm:$0xff]
        %v362 = vld [vmem:[%s335 + $0x18] sm:$0xff]
        %v363 = vmul.f32 %v351, 0.35355338
        %v364 = vmul.f32 %v352, 0.35355338
        %v365 = vmul.f32 %v353, 0.35355338
        %v366 = vmul.f32 %v354, 0.35355338
        %vm367 = vcmask 64512
        %v369 = vsel %vm367, %v363, 0
        %v372 = vsel %vm367, %v355, 0
        %374 = vmatpush.xpose.msra.mxu0 0.0
        %375 = vmatpush.xpose.msra.mxu0 0.0
        %376 = vmatpush.xpose.msra.mxu0 0.0
        %377 = vmatpush.xpose.msra.mxu0 0.0
        %378 = vmatpush.xpose.msra.mxu0 0.0
        %379 = vmatpush.xpose.msra.mxu0 0.0
        %380 = vmatpush.xpose.msra.mxu0 0.0
        %381 = vmatpush.xpose.msra.mxu0 0.0
        %382 = vmatpush.xpose.msra.mxu0 0.0
        %383 = vmatpush.xpose.msra.mxu0 0.0
        %384 = vmatpush.xpose.msra.mxu0 0.0
        %385 = vmatpush.xpose.msra.mxu0 0.0
        %386 = vmatpush.xpose.msra.mxu0 0.0
        %387 = vmatpush.xpose.msra.mxu0 0.0
        %388 = vmatpush.xpose.msra.mxu0 0.0
        %389 = vmatpush.xpose.msra.mxu0 %v372
        %390 = vmatmul.f32.gmra.mxu0 %v369
        %v391 = vpop.f32.mrf.mxu0
        %v392 = vadd.f32 0.0, %v391
        %393 = vdwg.mxu0
        %v395 = vsel %vm367, %v364, 0
        %v398 = vsel %vm367, %v356, 0
        %400 = vmatpush.xpose.msra.mxu0 0.0
        %401 = vmatpush.xpose.msra.mxu0 0.0
        %402 = vmatpush.xpose.msra.mxu0 0.0
        %403 = vmatpush.xpose.msra.mxu0 0.0
        %404 = vmatpush.xpose.msra.mxu0 0.0
        %405 = vmatpush.xpose.msra.mxu0 0.0
        %406 = vmatpush.xpose.msra.mxu0 0.0
        %407 = vmatpush.xpose.msra.mxu0 0.0
        %408 = vmatpush.xpose.msra.mxu0 0.0
        %409 = vmatpush.xpose.msra.mxu0 0.0
        %410 = vmatpush.xpose.msra.mxu0 0.0
        %411 = vmatpush.xpose.msra.mxu0 0.0
        %412 = vmatpush.xpose.msra.mxu0 0.0
        %413 = vmatpush.xpose.msra.mxu0 0.0
        %414 = vmatpush.xpose.msra.mxu0 0.0
        %415 = vmatpush.xpose.msra.mxu0 %v398
        %416 = vmatmul.f32.gmra.mxu0 %v395
        %v417 = vpop.f32.mrf.mxu0
        %v418 = vadd.f32 0.0, %v417
        %419 = vdwg.mxu0
        %v421 = vsel %vm367, %v365, 0
        %v424 = vsel %vm367, %v357, 0
        %426 = vmatpush.xpose.msra.mxu0 0.0
        %427 = vmatpush.xpose.msra.mxu0 0.0
        %428 = vmatpush.xpose.msra.mxu0 0.0
        %429 = vmatpush.xpose.msra.mxu0 0.0
        %430 = vmatpush.xpose.msra.mxu0 0.0
        %431 = vmatpush.xpose.msra.mxu0 0.0
        %432 = vmatpush.xpose.msra.mxu0 0.0
        %433 = vmatpush.xpose.msra.mxu0 0.0
        %434 = vmatpush.xpose.msra.mxu0 0.0
        %435 = vmatpush.xpose.msra.mxu0 0.0
        %436 = vmatpush.xpose.msra.mxu0 0.0
        %437 = vmatpush.xpose.msra.mxu0 0.0
        %438 = vmatpush.xpose.msra.mxu0 0.0
        %439 = vmatpush.xpose.msra.mxu0 0.0
        %440 = vmatpush.xpose.msra.mxu0 0.0
        %441 = vmatpush.xpose.msra.mxu0 %v424
        %442 = vmatmul.f32.gmra.mxu0 %v421
        %v443 = vpop.f32.mrf.mxu0
        %v444 = vadd.f32 0.0, %v443
        %445 = vdwg.mxu0
        %v447 = vsel %vm367, %v366, 0
        %v450 = vsel %vm367, %v358, 0
        %452 = vmatpush.xpose.msra.mxu0 0.0
        %453 = vmatpush.xpose.msra.mxu0 0.0
        %454 = vmatpush.xpose.msra.mxu0 0.0
        %455 = vmatpush.xpose.msra.mxu0 0.0
        %456 = vmatpush.xpose.msra.mxu0 0.0
        %457 = vmatpush.xpose.msra.mxu0 0.0
        %458 = vmatpush.xpose.msra.mxu0 0.0
        %459 = vmatpush.xpose.msra.mxu0 0.0
        %460 = vmatpush.xpose.msra.mxu0 0.0
        %461 = vmatpush.xpose.msra.mxu0 0.0
        %462 = vmatpush.xpose.msra.mxu0 0.0
        %463 = vmatpush.xpose.msra.mxu0 0.0
        %464 = vmatpush.xpose.msra.mxu0 0.0
        %465 = vmatpush.xpose.msra.mxu0 0.0
        %466 = vmatpush.xpose.msra.mxu0 0.0
        %467 = vmatpush.xpose.msra.mxu0 %v450
        %468 = vmatmul.f32.gmra.mxu0 %v447
        %v469 = vpop.f32.mrf.mxu0
        %v470 = vadd.f32 0.0, %v469
        %471 = vdwg.mxu0
        %v472 = vsel %vm367, %v392, -inf
        %473 = vmax.xlane.f32.xlu0 %v472
        %v474 = vpop.xlane.xlu0 %473
        %v475 = vsel %vm367, %v418, -inf
        %476 = vmax.xlane.f32.xlu0 %v475
        %v477 = vpop.xlane.xlu0 %476
        %v478 = vsel %vm367, %v444, -inf
        %479 = vmax.xlane.f32.xlu0 %v478
        %v480 = vpop.xlane.xlu0 %479
        %v481 = vsel %vm367, %v470, -inf
        %482 = vmax.xlane.f32.xlu0 %v481
        %v483 = vpop.xlane.xlu0 %482
        %v484 = vsub.f32 %v392, %v474
        %v485 = vsub.f32 %v418, %v477
        %v486 = vsub.f32 %v444, %v480
        %v487 = vsub.f32 %v470, %v483
        %v488 = vmul.f32 %v484, 1.442695
        %v489 = vpow.pop %v488
        %v490 = vmul.f32 %v485, 1.442695
        %v491 = vpow.pop %v490
        %v492 = vmul.f32 %v486, 1.442695
        %v493 = vpow.pop %v492
        %v494 = vmul.f32 %v487, 1.442695
        %v495 = vpow.pop %v494
        %v496 = vsel %vm367, %v489, 0.0
        %497 = vadd.xlane.f32.xlu0 %v496
        %v498 = vpop.xlane.xlu0 %497
        %v499 = vsel %vm367, %v491, 0.0
        %500 = vadd.xlane.f32.xlu0 %v499
        %v501 = vpop.xlane.xlu0 %500
        %v502 = vsel %vm367, %v493, 0.0
        %503 = vadd.xlane.f32.xlu0 %v502
        %v504 = vpop.xlane.xlu0 %503
        %v505 = vsel %vm367, %v495, 0.0
        %506 = vadd.xlane.f32.xlu0 %v505
        %v507 = vpop.xlane.xlu0 %506
        %v508 = vrcp.pop %v498
        %v509 = vmul.f32 %v498, %v508
        %v510 = vsub.f32 1.0, %v509
        %v511 = vmul.f32 %v508, %v510
        %v512 = vadd.f32 %v508, %v511
        %vm513 = vweird.f32 %v498
        %vm514 = vweird.f32 %v508
        %vm515 = vmor %vm513, %vm514
        %v516 = vsel %vm515, %v508, %v512
        %v517 = vand.u32 2147483647, %v498
        %vm518 = vcmp.eq.f32.partialorder %v517, 8.507059e+37
        %v519 = vand.u32 %v498, 2147483648
        %v520 = vor.u32 1.1754944e-38, %v519
        %v521 = vsel %vm518, %v520, %v516
        %v522 = vmul.f32 %v489, %v521
        %v523 = vrcp.pop %v501
        %v524 = vmul.f32 %v501, %v523
        %v525 = vsub.f32 1.0, %v524
        %v526 = vmul.f32 %v523, %v525
        %v527 = vadd.f32 %v523, %v526
        %vm528 = vweird.f32 %v501
        %vm529 = vweird.f32 %v523
        %vm530 = vmor %vm528, %vm529
        %v531 = vsel %vm530, %v523, %v527
        %v532 = vand.u32 2147483647, %v501
        %vm533 = vcmp.eq.f32.partialorder %v532, 8.507059e+37
        %v534 = vand.u32 %v501, 2147483648
        %v535 = vor.u32 1.1754944e-38, %v534
        %v536 = vsel %vm533, %v535, %v531
        %v537 = vmul.f32 %v491, %v536
        %v538 = vrcp.pop %v504
        %v539 = vmul.f32 %v504, %v538
        %v540 = vsub.f32 1.0, %v539
        %v541 = vmul.f32 %v538, %v540
        %v542 = vadd.f32 %v538, %v541
        %vm543 = vweird.f32 %v504
        %vm544 = vweird.f32 %v538
        %vm545 = vmor %vm543, %vm544
        %v546 = vsel %vm545, %v538, %v542
        %v547 = vand.u32 2147483647, %v504
        %vm548 = vcmp.eq.f32.partialorder %v547, 8.507059e+37
        %v549 = vand.u32 %v504, 2147483648
        %v550 = vor.u32 1.1754944e-38, %v549
        %v551 = vsel %vm548, %v550, %v546
        %v552 = vmul.f32 %v493, %v551
        %v553 = vrcp.pop %v507
        %v554 = vmul.f32 %v507, %v553
        %v555 = vsub.f32 1.0, %v554
        %v556 = vmul.f32 %v553, %v555
        %v557 = vadd.f32 %v553, %v556
        %vm558 = vweird.f32 %v507
        %vm559 = vweird.f32 %v553
        %vm560 = vmor %vm558, %vm559
        %v561 = vsel %vm560, %v553, %v557
        %v562 = vand.u32 2147483647, %v507
        %vm563 = vcmp.eq.f32.partialorder %v562, 8.507059e+37
        %v564 = vand.u32 %v507, 2147483648
        %v565 = vor.u32 1.1754944e-38, %v564
        %v566 = vsel %vm563, %v565, %v561
        %v567 = vmul.f32 %v495, %v566
        %v569 = vsel %vm367, %v522, 0
        %571 = vmatpush.msra.mxu0 0.0
        %572 = vmatpush.msra.mxu0 0.0
        %573 = vmatpush.msra.mxu0 0.0
        %574 = vmatpush.msra.mxu0 0.0
        %575 = vmatpush.msra.mxu0 0.0
        %576 = vmatpush.msra.mxu0 0.0
        %577 = vmatpush.msra.mxu0 0.0
        %578 = vmatpush.msra.mxu0 0.0
        %579 = vmatpush.msra.mxu0 0.0
        %580 = vmatpush.msra.mxu0 0.0
        %581 = vmatpush.msra.mxu0 0.0
        %582 = vmatpush.msra.mxu0 0.0
        %583 = vmatpush.msra.mxu0 0.0
        %584 = vmatpush.msra.mxu0 0.0
        %585 = vmatpush.msra.mxu0 0.0
        %586 = vmatpush.msra.mxu0 %v359
        %587 = vmatmul.f32.gmra.mxu0 %v569
        %v588 = vpop.f32.mrf.mxu0
        %v589 = vadd.f32 0.0, %v588
        %590 = vdwg.mxu0
        %v592 = vsel %vm367, %v537, 0
        %594 = vmatpush.msra.mxu0 0.0
        %595 = vmatpush.msra.mxu0 0.0
        %596 = vmatpush.msra.mxu0 0.0
        %597 = vmatpush.msra.mxu0 0.0
        %598 = vmatpush.msra.mxu0 0.0
        %599 = vmatpush.msra.mxu0 0.0
        %600 = vmatpush.msra.mxu0 0.0
        %601 = vmatpush.msra.mxu0 0.0
        %602 = vmatpush.msra.mxu0 0.0
        %603 = vmatpush.msra.mxu0 0.0
        %604 = vmatpush.msra.mxu0 0.0
        %605 = vmatpush.msra.mxu0 0.0
        %606 = vmatpush.msra.mxu0 0.0
        %607 = vmatpush.msra.mxu0 0.0
        %608 = vmatpush.msra.mxu0 0.0
        %609 = vmatpush.msra.mxu0 %v360
        %610 = vmatmul.f32.gmra.mxu0 %v592
        %v611 = vpop.f32.mrf.mxu0
        %v612 = vadd.f32 0.0, %v611
        %613 = vdwg.mxu0
        %v615 = vsel %vm367, %v552, 0
        %617 = vmatpush.msra.mxu0 0.0
        %618 = vmatpush.msra.mxu0 0.0
        %619 = vmatpush.msra.mxu0 0.0
        %620 = vmatpush.msra.mxu0 0.0
        %621 = vmatpush.msra.mxu0 0.0
        %622 = vmatpush.msra.mxu0 0.0
        %623 = vmatpush.msra.mxu0 0.0
        %624 = vmatpush.msra.mxu0 0.0
        %625 = vmatpush.msra.mxu0 0.0
        %626 = vmatpush.msra.mxu0 0.0
        %627 = vmatpush.msra.mxu0 0.0
        %628 = vmatpush.msra.mxu0 0.0
        %629 = vmatpush.msra.mxu0 0.0
        %630 = vmatpush.msra.mxu0 0.0
        %631 = vmatpush.msra.mxu0 0.0
        %632 = vmatpush.msra.mxu0 %v361
        %633 = vmatmul.f32.gmra.mxu0 %v615
        %v634 = vpop.f32.mrf.mxu0
        %v635 = vadd.f32 0.0, %v634
        %636 = vdwg.mxu0
        %v638 = vsel %vm367, %v567, 0
        %640 = vmatpush.msra.mxu0 0.0
        %641 = vmatpush.msra.mxu0 0.0
        %642 = vmatpush.msra.mxu0 0.0
        %643 = vmatpush.msra.mxu0 0.0
        %644 = vmatpush.msra.mxu0 0.0
        %645 = vmatpush.msra.mxu0 0.0
        %646 = vmatpush.msra.mxu0 0.0
        %647 = vmatpush.msra.mxu0 0.0
        %648 = vmatpush.msra.mxu0 0.0
        %649 = vmatpush.msra.mxu0 0.0
        %650 = vmatpush.msra.mxu0 0.0
        %651 = vmatpush.msra.mxu0 0.0
        %652 = vmatpush.msra.mxu0 0.0
        %653 = vmatpush.msra.mxu0 0.0
        %654 = vmatpush.msra.mxu0 0.0
        %655 = vmatpush.msra.mxu0 %v362
        %656 = vmatmul.f32.gmra.mxu0 %v638
        %v657 = vpop.f32.mrf.mxu0
        %v658 = vadd.f32 0.0, %v657
        %659 = vdwg.mxu0
        %660 = vst.msk [vmem:[%s303] sm:$0xff] %vm367, %v522
        %661 = vst.msk [vmem:[%s303 + $0x8] sm:$0xff] %vm367, %v537
        %662 = vst.msk [vmem:[%s303 + $0x10] sm:$0xff] %vm367, %v552
        %663 = vst.msk [vmem:[%s303 + $0x18] sm:$0xff] %vm367, %v567
        %664 = vst.msk [vmem:[%s348] sm:$0xff] %vm367, %v589
        %665 = vst.msk [vmem:[%s348 + $0x8] sm:$0xff] %vm367, %v612
        %666 = vst.msk [vmem:[%s348 + $0x10] sm:$0xff] %vm367, %v635
        %667 = vst.msk [vmem:[%s348 + $0x18] sm:$0xff] %vm367, %v658
        %s668 = smul.u32 4, %s25
        %p669 = scmp.lt.s32.totalorder %s24, 1
        %s670 = scalar_select %p669, %s24, 1
        %p671 = scmp.lt.s32.totalorder %s668, 3
        %s672 = scalar_select %p671, %s668, 3
        %p673 = scmp.lt.s32.totalorder %s26, 0
        %s674 = scalar_select %p673, %s26, 0
        %s675 = sadd.s32 %s674, %s672
        %s676 = smul.addr %s670, 4
        %s677 = sadd.s32 %s675, %s676
        %s678 = smul.addr %s677, 8
        %s679 = scalar_lea.vmem %s3, %s678
        %s680 = sand.u32 %s166, 1
        %s681 = scalar_lea.sflag [#allocation3], %s680
        %s682 = sand.u32 %s166, 1
        %s683 = smul.addr %s682, 32
        %s684 = scalar_lea.vmem [#allocation2], %s683
        // Predicated region
        $region33: #{self_attention_forward.8} parent=31 // pred_check
          %p685 = pneg %p146
        $region34: #{self_attention_forward.8} parent=31 // pred_check_branch
          %687 = sbr.rel (%p685) target = $region36
        $region35: #{self_attention_forward.8} parent=31 // pred_region
          %s688 = smul.u32 4, %s25
        $region36: #{self_attention_forward.8} parent=31 // pred_fallthru
          _
        // Predicated region
        $region37: #{self_attention_forward.8} parent=31 // pred_check
          %p689 = pneg %p176
        $region38: #{self_attention_forward.8} parent=31 // pred_check_branch
          %691 = sbr.rel (%p689) target = $region40
        $region39: #{self_attention_forward.8} parent=31 // pred_region
          %s692 = smul.u32 4, %s25
          %694 = vsyncadd %s681, 0
          %s695 = sadd.s32 %s26, %s692
          %s696 = smul.addr %s24, 4
          %s697 = sadd.s32 %s695, %s696
          %s698 = smul.addr %s697, 8
          %s699 = scalar_lea.hbm %s4, %s698
          %s700 = sshll.u32 %s684, 4
          %s701 = int_to_ptr.vmem [resolvable:$true] %s700
          %s702 = sshll.u32 %s699, 4
          %s703 = int_to_ptr.hbm [resolvable:$true] %s702
          %708 = dma.vmem_to_hbm [thread:$0]  %s701, 512, %s703, %s681, 128, 128, 8
        $region40: #{self_attention_forward.8} parent=31 // pred_fallthru
          _
      $region32: #{self_attention_forward.8} parent=5 // pred_fallthru
        _
      %p709 = scmp.le.s32.totalorder 2, %s14
      // Predicated region
      $region41: #{self_attention_forward.8} parent=5 // pred_check
        %p710 = pneg %p709
      $region42: #{self_attention_forward.8} parent=5 // pred_check_branch
        %712 = sbr.rel (%p710) target = $region44
      $region43: #{self_attention_forward.8} parent=5 // pred_region
        %s713 = ssub.s32 %s14, 2
        // Predicated region
        $region45: #{self_attention_forward.8} parent=43 // pred_check
          %p714 = pneg %p152
        $region46: #{self_attention_forward.8} parent=43 // pred_check_branch
          %716 = sbr.rel (%p714) target = $region48
        $region47: #{self_attention_forward.8} parent=43 // pred_region
          %s717 = smul.u32 4, %s28
          %p718 = scmp.lt.s32.totalorder %s27, 1
          %s719 = scalar_select %p718, %s27, 1
          %p720 = scmp.lt.s32.totalorder %s717, 3
          %s721 = scalar_select %p720, %s717, 3
          %p722 = scmp.lt.s32.totalorder %s29, 0
          %s723 = scalar_select %p722, %s29, 0
          %s724 = sadd.s32 %s723, %s721
          %s725 = smul.addr %s719, 4
          %s726 = sadd.s32 %s724, %s725
          %s727 = smul.addr %s726, 8
          %s728 = scalar_lea.vmem %s3, %s727
        $region48: #{self_attention_forward.8} parent=43 // pred_fallthru
          _
        // Predicated region
        $region49: #{self_attention_forward.8} parent=43 // pred_check
          %p729 = pneg %p182
        $region50: #{self_attention_forward.8} parent=43 // pred_check_branch
          %731 = sbr.rel (%p729) target = $region52
        $region51: #{self_attention_forward.8} parent=43 // pred_region
          %s732 = sand.u32 %s167, 1
          %s733 = scalar_lea.sflag [#allocation3], %s732
          %s734 = sand.u32 %s167, 1
          %s735 = smul.addr %s734, 32
          %s736 = scalar_lea.vmem [#allocation2], %s735
          %738 = dma.done %s733, 512
        $region52: #{self_attention_forward.8} parent=43 // pred_fallthru
          _
      $region44: #{self_attention_forward.8} parent=5 // pred_fallthru
        _
    $region6: #{self_attention_forward.8} parent=1 // loop_footer
      %s18 = sadd.s32 1, %s14
    $region7: #{self_attention_forward.8} parent=1 // loop_footer_branch
      %13 = sbr.rel target = $region3
    $region8: #{self_attention_forward.8} parent=1 // loop_exit
      _
    %739 = vsyncpa [#allocation3], 1
    %s740 = scalar_lea.sflag [#allocation3], 1
    %741 = vsyncpa %s740, 1

// kernel: self_attention_forward.9
$region0: #{self_attention_forward.9}
  #allocation0 [shape = 'u32[]', space=smem, size = 0x4, offset = 0x4, fixed_abs, tag = 'smem constant byte address 0x4 - core index']
  #allocation1 [shape = 'u32[72,128]{1,0:T(1,128)}', space=vmem, size = 0x9000, scoped, tag = 'internal scratch']
  %s0 = inlined_call_operand.vmem [shape: f32[2,4,8,8], index: 0, kind: input, shape index: {}]
  %s1 = inlined_call_operand.vmem [shape: f32[4,8,32], index: 1, kind: input, shape index: {}]
  %s2 = inlined_call_operand.vmem [shape: f32[1,32], index: 2, kind: input, shape index: {}]
  %s3 = inlined_call_operand.hbm [shape: f32[2,8,32], index: 3, kind: output, shape index: {}]
  %s4 = sld [smem:[#allocation0]]
  $region45: #{self_attention_forward.9} parent=0
    _
  %s6 = ssub.s32 1, %s4
  %s7 = scalar_select 0, %s6, %s4
  $region1: #{self_attention_forward.9} parent=0
    #allocation2 [shape = 'u8[8192]{0}', space=vmem, size = 0x2000, scoped, tag = 'output window, operand 0']
    #allocation3 [shape = 's32[2]{0}', space=sflag, size = 0x8, scoped, tag = 'scoped memory for self_attention_forward.9']
    %8 = vsyncpa [#allocation3], 0
    %s9 = scalar_lea.sflag [#allocation3], 1
    %10 = vsyncpa %s9, 0
    loop: start=0, step=1, limit=4
    $region2: #{self_attention_forward.9} parent=1 // loop_pre_header
      _
    $region3: #{self_attention_forward.9} parent=1 // loop_header
      %s12 = sphi 0, %s16
      %p13 = scmp.ge.s32.totalorder %s12, 4
      %s19 = sphi 0, %s38
      %s20 = sphi 0, %s34
      %s21 = sphi 0, %s30
      %s22 = sphi 0, %s19
      %s23 = sphi 0, %s20
      %s24 = sphi 0, %s21
      %s25 = sphi 0, %s22
      %s26 = sphi 0, %s23
      %s27 = sphi 0, %s24
      %s43 = sphi 0, %s45
      %s46 = sphi 0, %s43
      %s47 = sphi 0, %s46
      %s63 = sphi 0, %s47
      %s69 = sphi 0, %s71
      %s72 = sphi 0, %s69
      %s73 = sphi 0, %s72
      %s89 = sphi 0, %s73
      %s95 = sphi 0, %s97
      %s98 = sphi 0, %s95
      %s99 = sphi 0, %s98
      %s115 = sphi 0, %s99
      %s125 = sphi 0, %s127
      %s128 = sphi 0, %s125
      %s129 = sphi 0, %s128
      %s145 = sphi 0, %s129
    $region4: #{self_attention_forward.9} parent=1 // loop_header_branch
      %15 = sbr.rel (%p13) target = $region8
    $region5: #{self_attention_forward.9} parent=1 // loop_body
      %s17 = ssub.s32 %s12, 1
      %s18 = ssub.s32 %s12, 2
      %s28 = sadd.s32 1, %s21
      %p29 = scmp.ge.s32.totalorder %s28, 1
      %s30 = scalar_select %p29, 0, %s28
      %s31 = sadd.s32 1, %s20
      %s32 = scalar_select %p29, %s31, %s20
      %p33 = scmp.ge.s32.totalorder %s32, 2
      %s34 = scalar_select %p33, 0, %s32
      %s35 = sadd.s32 1, %s19
      %s36 = scalar_select %p33, %s35, %s19
      %p37 = scmp.ge.s32.totalorder %s36, 1
      %s38 = scalar_select %p37, 0, %s36
      %s39 = ssub.s32 %s20, %s34
      %s40 = ssub.s32 %s21, %s30
      %s41 = sor.u32 %s39, %s40
      %p42 = scmp.eq.s32.totalorder %s41, 0
      %s44 = sadd.s32 %s43, 1
      %s45 = scalar_select %p42, %s43, %s44
      %p48 = pneg %p42
      %p49 = scmp.eq.s32.totalorder %s12, 1
      %p50 = por %p48, %p49
      %p51 = scmp.ne.s32.totalorder %s43, %s46
      %p52 = scmp.eq.s32.totalorder %s12, 0
      %p53 = por %p51, %p52
      %p54 = scmp.ne.s32.totalorder %s43, %s46
      %p55 = scmp.eq.s32.totalorder %s17, 1
      %p56 = por %p54, %p55
      %p57 = scmp.ne.s32.totalorder %s46, %s47
      %p58 = scmp.eq.s32.totalorder %s17, 0
      %p59 = por %p57, %p58
      %p60 = scmp.ne.s32.totalorder %s46, %s47
      %p61 = scmp.eq.s32.totalorder %s18, 1
      %p62 = por %p60, %p61
      %p64 = scmp.ne.s32.totalorder %s47, %s63
      %p65 = scmp.eq.s32.totalorder %s18, 0
      %p66 = por %p64, %p65
      %s67 = ssub.s32 %s19, %s38
      %p68 = scmp.eq.s32.totalorder %s67, 0
      %s70 = sadd.s32 %s69, 1
      %s71 = scalar_select %p68, %s69, %s70
      %p74 = pneg %p68
      %p75 = scmp.eq.s32.totalorder %s12, 1
      %p76 = por %p74, %p75
      %p77 = scmp.ne.s32.totalorder %s69, %s72
      %p78 = scmp.eq.s32.totalorder %s12, 0
      %p79 = por %p77, %p78
      %p80 = scmp.ne.s32.totalorder %s69, %s72
      %p81 = scmp.eq.s32.totalorder %s17, 1
      %p82 = por %p80, %p81
      %p83 = scmp.ne.s32.totalorder %s72, %s73
      %p84 = scmp.eq.s32.totalorder %s17, 0
      %p85 = por %p83, %p84
      %p86 = scmp.ne.s32.totalorder %s72, %s73
      %p87 = scmp.eq.s32.totalorder %s18, 1
      %p88 = por %p86, %p87
      %p90 = scmp.ne.s32.totalorder %s73, %s89
      %p91 = scmp.eq.s32.totalorder %s18, 0
      %p92 = por %p90, %p91
      %s93 = ssub.s32 %s19, %s38
      %p94 = scmp.eq.s32.totalorder %s93, 0
      %s96 = sadd.s32 %s95, 1
      %s97 = scalar_select %p94, %s95, %s96
      %p100 = pneg %p94
      %p101 = scmp.eq.s32.totalorder %s12, 1
      %p102 = por %p100, %p101
      %p103 = scmp.ne.s32.totalorder %s95, %s98
      %p104 = scmp.eq.s32.totalorder %s12, 0
      %p105 = por %p103, %p104
      %p106 = scmp.ne.s32.totalorder %s95, %s98
      %p107 = scmp.eq.s32.totalorder %s17, 1
      %p108 = por %p106, %p107
      %p109 = scmp.ne.s32.totalorder %s98, %s99
      %p110 = scmp.eq.s32.totalorder %s17, 0
      %p111 = por %p109, %p110
      %p112 = scmp.ne.s32.totalorder %s98, %s99
      %p113 = scmp.eq.s32.totalorder %s18, 1
      %p114 = por %p112, %p113
      %p116 = scmp.ne.s32.totalorder %s99, %s115
      %p117 = scmp.eq.s32.totalorder %s18, 0
      %p118 = por %p116, %p117
      %s119 = ssub.s32 %s20, %s34
      %s120 = ssub.s32 %s21, %s30
      %s121 = sor.u32 %s119, %s120
      %s122 = ssub.s32 %s19, %s38
      %s123 = sor.u32 %s121, %s122
      %p124 = scmp.eq.s32.totalorder %s123, 0
      %s126 = sadd.s32 %s125, 1
      %s127 = scalar_select %p124, %s125, %s126
      %p130 = pneg %p124
      %p131 = scmp.eq.s32.totalorder %s12, 1
      %p132 = por %p130, %p131
      %p133 = scmp.ne.s32.totalorder %s125, %s128
      %p134 = scmp.eq.s32.totalorder %s12, 0
      %p135 = por %p133, %p134
      %p136 = scmp.ne.s32.totalorder %s125, %s128
      %p137 = scmp.eq.s32.totalorder %s17, 1
      %p138 = por %p136, %p137
      %p139 = scmp.ne.s32.totalorder %s128, %s129
      %p140 = scmp.eq.s32.totalorder %s17, 0
      %p141 = por %p139, %p140
      %p142 = scmp.ne.s32.totalorder %s128, %s129
      %p143 = scmp.eq.s32.totalorder %s18, 1
      %p144 = por %p142, %p143
      %p146 = scmp.ne.s32.totalorder %s129, %s145
      %p147 = scmp.eq.s32.totalorder %s18, 0
      %p148 = por %p146, %p147
      %p149 = scmp.le.s32.totalorder 1, %s12
      %p150 = scmp.lt.s32.totalorder %s12, 3
      %p151 = pnand %p149, %p150
      %p152 = pneg %p151
      // Predicated region
      $region9: #{self_attention_forward.9} parent=5 // pred_check
        _
      $region10: #{self_attention_forward.9} parent=5 // pred_check_branch
        %154 = sbr.rel (%p151) target = $region12
      $region11: #{self_attention_forward.9} parent=5 // pred_region
        %s155 = ssub.s32 %s12, 1
        // Predicated region
        $region13: #{self_attention_forward.9} parent=11 // pred_check
          %p156 = pneg %p85
        $region14: #{self_attention_forward.9} parent=11 // pred_check_branch
          %158 = sbr.rel (%p156) target = $region16
        $region15: #{self_attention_forward.9} parent=11 // pred_region
          %p159 = scmp.lt.s32.totalorder %s22, 0
          %s160 = scalar_select %p159, %s22, 0
          %s161 = smul.addr %s160, 8
          %s162 = scalar_lea.vmem %s1, %s161
        $region16: #{self_attention_forward.9} parent=11 // pred_fallthru
          _
        // Predicated region
        $region17: #{self_attention_forward.9} parent=11 // pred_check
          %p163 = pneg %p111
        $region18: #{self_attention_forward.9} parent=11 // pred_check_branch
          %165 = sbr.rel (%p163) target = $region20
        $region19: #{self_attention_forward.9} parent=11 // pred_region
          %p166 = scmp.lt.s32.totalorder %s22, 0
          %s167 = scalar_select %p166, %s22, 0
          %s168 = scalar_lea.vmem %s2, %s167
        $region20: #{self_attention_forward.9} parent=11 // pred_fallthru
          _
      $region12: #{self_attention_forward.9} parent=5 // pred_fallthru
        _
      %p169 = scmp.lt.s32.totalorder %s12, 2
      // Predicated region
      $region21: #{self_attention_forward.9} parent=5 // pred_check
        %p170 = pneg %p169
      $region22: #{self_attention_forward.9} parent=5 // pred_check_branch
        %172 = sbr.rel (%p170) target = $region24
      $region23: #{self_attention_forward.9} parent=5 // pred_region
        // Predicated region
        $region25: #{self_attention_forward.9} parent=23 // pred_check
          %p173 = pneg %p53
        $region26: #{self_attention_forward.9} parent=23 // pred_check_branch
          %175 = sbr.rel (%p173) target = $region28
        $region27: #{self_attention_forward.9} parent=23 // pred_region
          %p176 = scmp.lt.s32.totalorder %s20, 1
          %s177 = scalar_select %p176, %s20, 1
          %p178 = scmp.lt.s32.totalorder %s21, 0
          %s179 = scalar_select %p178, %s21, 0
          %s180 = smul.addr %s177, 4
          %s181 = sadd.s32 %s179, %s180
          %s182 = smul.addr %s181, 8
          %s183 = scalar_lea.vmem %s0, %s182
        $region28: #{self_attention_forward.9} parent=23 // pred_fallthru
          _
      $region24: #{self_attention_forward.9} parent=5 // pred_fallthru
        _
      %p184 = scmp.le.s32.totalorder 1, %s12
      %p185 = scmp.lt.s32.totalorder %s12, 3
      %p186 = pnand %p184, %p185
      %p187 = pneg %p186
      // Predicated region
      $region29: #{self_attention_forward.9} parent=5 // pred_check
        _
      $region30: #{self_attention_forward.9} parent=5 // pred_check_branch
        %189 = sbr.rel (%p186) target = $region32
      $region31: #{self_attention_forward.9} parent=5 // pred_region
        %s190 = ssub.s32 %s12, 1
        %p191 = scmp.lt.s32.totalorder %s23, 1
        %s192 = scalar_select %p191, %s23, 1
        %p193 = scmp.lt.s32.totalorder %s24, 0
        %s194 = scalar_select %p193, %s24, 0
        %s195 = smul.addr %s192, 4
        %s196 = sadd.s32 %s194, %s195
        %s197 = smul.addr %s196, 8
        %s198 = scalar_lea.vmem %s0, %s197
        %p199 = pneg %p59
        %p200 = pneg %p56
        %p201 = scmp.lt.s32.totalorder %s22, 0
        %s202 = scalar_select %p201, %s22, 0
        %s203 = smul.addr %s202, 8
        %s204 = scalar_lea.vmem %s1, %s203
        %p205 = pneg %p85
        %p206 = pneg %p82
        %p207 = scmp.lt.s32.totalorder %s22, 0
        %s208 = scalar_select %p207, %s22, 0
        %s209 = scalar_lea.vmem %s2, %s208
        %p210 = pneg %p111
        %p211 = pneg %p108
        %p212 = pneg %p141
        %p213 = pneg %p138
        %s214 = sand.u32 %s128, 1
        %s215 = scalar_lea.sflag [#allocation3], %s214
        %s216 = sand.u32 %s128, 1
        %s217 = smul.addr %s216, 8
        %s218 = scalar_lea.vmem [#allocation2], %s217
        %p219 = scmp.lt.s32.totalorder %s23, 1
        %s220 = scalar_select %p219, %s23, 1
        %p221 = scmp.lt.s32.totalorder %s24, 0
        %s222 = scalar_select %p221, %s24, 0
        %s223 = smul.addr %s220, 4
        %s224 = sadd.s32 %s222, %s223
        %s225 = smul.addr %s224, 8
        %s226 = scalar_lea.vmem %s0, %s225
        %p227 = scmp.lt.s32.totalorder %s22, 0
        %s228 = scalar_select %p227, %s22, 0
        %s229 = smul.addr %s228, 8
        %s230 = scalar_lea.vmem %s1, %s229
        %p231 = scmp.lt.s32.totalorder %s22, 0
        %s232 = scalar_select %p231, %s22, 0
        %s233 = scalar_lea.vmem %s2, %s232
        %v234 = vld [vmem:[%s226] sm:$0xff]
        %v235 = vld [vmem:[%s230] sm:$0xff]
        %s236 = scalar_lea.vmem %s226, 8
        %v237 = vld [vmem:[%s236] sm:$0xff]
        %s238 = scalar_lea.vmem %s230, 8
        %v239 = vld [vmem:[%s238] sm:$0xff]
        %vm240 = vcmask 64512
        %v242 = vsel %vm240, %v237, 0
        %244 = vmatpush.msra.mxu0 0.0
        %245 = vmatpush.msra.mxu0 0.0
        %246 = vmatpush.msra.mxu0 0.0
        %247 = vmatpush.msra.mxu0 0.0
        %248 = vmatpush.msra.mxu0 0.0
        %249 = vmatpush.msra.mxu0 0.0
        %250 = vmatpush.msra.mxu0 0.0
        %251 = vmatpush.msra.mxu0 0.0
        %252 = vmatpush.msra.mxu0 0.0
        %253 = vmatpush.msra.mxu0 0.0
        %254 = vmatpush.msra.mxu0 0.0
        %255 = vmatpush.msra.mxu0 0.0
        %256 = vmatpush.msra.mxu0 0.0
        %257 = vmatpush.msra.mxu0 0.0
        %258 = vmatpush.msra.mxu0 0.0
        %259 = vmatpush.msra.mxu0 %v239
        %260 = vmatmul.f32.gmra.mxu0 %v242
        %v261 = vpop.f32.mrf.mxu0
        %v262 = vadd.f32 0.0, %v261
        %263 = vdwg.mxu0
        %v265 = vsel %vm240, %v234, 0
        %267 = vmatpush.msra.mxu0 0.0
        %268 = vmatpush.msra.mxu0 0.0
        %269 = vmatpush.msra.mxu0 0.0
        %270 = vmatpush.msra.mxu0 0.0
        %271 = vmatpush.msra.mxu0 0.0
        %272 = vmatpush.msra.mxu0 0.0
        %273 = vmatpush.msra.mxu0 0.0
        %274 = vmatpush.msra.mxu0 0.0
        %275 = vmatpush.msra.mxu0 0.0
        %276 = vmatpush.msra.mxu0 0.0
        %277 = vmatpush.msra.mxu0 0.0
        %278 = vmatpush.msra.mxu0 0.0
        %279 = vmatpush.msra.mxu0 0.0
        %280 = vmatpush.msra.mxu0 0.0
        %281 = vmatpush.msra.mxu0 0.0
        %282 = vmatpush.msra.mxu0 %v235
        %283 = vmatmul.f32.gmra.mxu0 %v265
        %v284 = vpop.f32.mrf.mxu0
        %v285 = vadd.f32 %v262, %v284
        %286 = vdwg.mxu0
        %s287 = scalar_lea.vmem %s226, 16
        %v288 = vld [vmem:[%s287] sm:$0xff]
        %s289 = scalar_lea.vmem %s230, 16
        %v290 = vld [vmem:[%s289] sm:$0xff]
        %v292 = vsel %vm240, %v288, 0
        %294 = vmatpush.msra.mxu0 0.0
        %295 = vmatpush.msra.mxu0 0.0
        %296 = vmatpush.msra.mxu0 0.0
        %297 = vmatpush.msra.mxu0 0.0
        %298 = vmatpush.msra.mxu0 0.0
        %299 = vmatpush.msra.mxu0 0.0
        %300 = vmatpush.msra.mxu0 0.0
        %301 = vmatpush.msra.mxu0 0.0
        %302 = vmatpush.msra.mxu0 0.0
        %303 = vmatpush.msra.mxu0 0.0
        %304 = vmatpush.msra.mxu0 0.0
        %305 = vmatpush.msra.mxu0 0.0
        %306 = vmatpush.msra.mxu0 0.0
        %307 = vmatpush.msra.mxu0 0.0
        %308 = vmatpush.msra.mxu0 0.0
        %309 = vmatpush.msra.mxu0 %v290
        %310 = vmatmul.f32.gmra.mxu0 %v292
        %v311 = vpop.f32.mrf.mxu0
        %v312 = vadd.f32 0.0, %v311
        %313 = vdwg.mxu0
        %v314 = vadd.f32 %v285, %v312
        %s315 = scalar_lea.vmem %s226, 24
        %v316 = vld [vmem:[%s315] sm:$0xff]
        %s317 = scalar_lea.vmem %s230, 24
        %v318 = vld [vmem:[%s317] sm:$0xff]
        %v320 = vsel %vm240, %v316, 0
        %322 = vmatpush.msra.mxu0 0.0
        %323 = vmatpush.msra.mxu0 0.0
        %324 = vmatpush.msra.mxu0 0.0
        %325 = vmatpush.msra.mxu0 0.0
        %326 = vmatpush.msra.mxu0 0.0
        %327 = vmatpush.msra.mxu0 0.0
        %328 = vmatpush.msra.mxu0 0.0
        %329 = vmatpush.msra.mxu0 0.0
        %330 = vmatpush.msra.mxu0 0.0
        %331 = vmatpush.msra.mxu0 0.0
        %332 = vmatpush.msra.mxu0 0.0
        %333 = vmatpush.msra.mxu0 0.0
        %334 = vmatpush.msra.mxu0 0.0
        %335 = vmatpush.msra.mxu0 0.0
        %336 = vmatpush.msra.mxu0 0.0
        %337 = vmatpush.msra.mxu0 %v318
        %338 = vmatmul.f32.gmra.mxu0 %v320
        %v339 = vpop.f32.mrf.mxu0
        %v340 = vadd.f32 0.0, %v339
        %341 = vdwg.mxu0
        %v342 = vadd.f32 %v314, %v340
        %v343 = vld [vmem:[%s233] sm:$0x1]
        %v345 = vperm.slane %v343, 0
        %v347 = vadd.f32 %v342, %v345
        %vm348 = vcmask 261120
        %349 = vst.msk [vmem:[%s218] sm:$0xff] %vm348, %v347
        %s350 = sand.u32 %s128, 1
        %s351 = scalar_lea.sflag [#allocation3], %s350
        %s352 = sand.u32 %s128, 1
        %s353 = smul.addr %s352, 8
        %s354 = scalar_lea.vmem [#allocation2], %s353
        // Predicated region
        $region33: #{self_attention_forward.9} parent=31 // pred_check
          %p355 = pneg %p138
        $region34: #{self_attention_forward.9} parent=31 // pred_check_branch
          %357 = sbr.rel (%p355) target = $region36
        $region35: #{self_attention_forward.9} parent=31 // pred_region
          %359 = vsyncadd %s351, 0
          %s360 = sadd.s32 %s22, %s24
          %s361 = sadd.s32 %s360, %s23
          %s362 = smul.addr %s361, 8
          %s363 = scalar_lea.hbm %s3, %s362
          %s365 = sshll.u32 %s354, 4
          %s366 = int_to_ptr.vmem [resolvable:$true] %s365
          %s367 = sshll.u32 %s363, 4
          %s368 = int_to_ptr.hbm [resolvable:$true] %s367
          %370 = dma.vmem_to_hbm [thread:$0]  %s366, 128, %s368, %s351
        $region36: #{self_attention_forward.9} parent=31 // pred_fallthru
          _
      $region32: #{self_attention_forward.9} parent=5 // pred_fallthru
        _
      %p371 = scmp.le.s32.totalorder 2, %s12
      // Predicated region
      $region37: #{self_attention_forward.9} parent=5 // pred_check
        %p372 = pneg %p371
      $region38: #{self_attention_forward.9} parent=5 // pred_check_branch
        %374 = sbr.rel (%p372) target = $region40
      $region39: #{self_attention_forward.9} parent=5 // pred_region
        %s375 = ssub.s32 %s12, 2
        // Predicated region
        $region41: #{self_attention_forward.9} parent=39 // pred_check
          %p376 = pneg %p144
        $region42: #{self_attention_forward.9} parent=39 // pred_check_branch
          %378 = sbr.rel (%p376) target = $region44
        $region43: #{self_attention_forward.9} parent=39 // pred_region
          %s379 = sand.u32 %s129, 1
          %s380 = scalar_lea.sflag [#allocation3], %s379
          %s381 = sand.u32 %s129, 1
          %s382 = smul.addr %s381, 8
          %s383 = scalar_lea.vmem [#allocation2], %s382
          %385 = dma.done %s380, 128
        $region44: #{self_attention_forward.9} parent=39 // pred_fallthru
          _
      $region40: #{self_attention_forward.9} parent=5 // pred_fallthru
        _
    $region6: #{self_attention_forward.9} parent=1 // loop_footer
      %s16 = sadd.s32 1, %s12
    $region7: #{self_attention_forward.9} parent=1 // loop_footer_branch
      %11 = sbr.rel target = $region3
    $region8: #{self_attention_forward.9} parent=1 // loop_exit
      _
    %386 = vsyncpa [#allocation3], 1
    %s387 = scalar_lea.sflag [#allocation3], 1
    %388 = vsyncpa %s387, 1

// kernel: self_attention_forward.6
$region0: #{self_attention_forward.6}
  #allocation0 [shape = 'u32[]', space=smem, size = 0x4, offset = 0x4, fixed_abs, tag = 'smem constant byte address 0x4 - core index']
  #allocation1 [shape = 'u32[72,128]{1,0:T(1,128)}', space=vmem, size = 0x9000, scoped, tag = 'internal scratch']
  %s0 = inlined_call_operand.hbm [shape: f32[2,8,32], index: 0, kind: input, shape index: {}]
  %s1 = inlined_call_operand.hbm [shape: f32[32,32], index: 1, kind: input, shape index: {}]
  %s2 = inlined_call_operand.hbm [shape: f32[1,32], index: 2, kind: input, shape index: {}]
  %s3 = inlined_call_operand.vmem [shape: f32[2,4,8,8], index: 3, kind: output, shape index: {}]
  %s4 = sld [smem:[#allocation0]]
  $region57: #{self_attention_forward.6} parent=0
    _
  %s6 = ssub.s32 1, %s4
  %s7 = scalar_select 0, %s6, %s4
  $region1: #{self_attention_forward.6} parent=0
    #allocation2 [shape = 'u8[8192]{0}', space=vmem, size = 0x2000, scoped, tag = 'input window, operand 0']
    #allocation3 [shape = 's32[2]{0}', space=sflag, size = 0x8, scoped, tag = 'scoped memory for self_attention_forward.6']
    #allocation4 [shape = 'u8[16384]{0}', space=vmem, size = 0x4000, scoped, tag = 'input window, operand 1, single buffered']
    #allocation5 [shape = 's32[1]{0}', space=sflag, size = 0x4, scoped, tag = 'scoped memory for self_attention_forward.6']
    #allocation6 [shape = 'u8[512]{0}', space=vmem, size = 0x400, scoped, tag = 'input window, operand 2, single buffered']
    %8 = vsyncpa [#allocation3], 0
    %s9 = scalar_lea.sflag [#allocation3], 1
    %10 = vsyncpa %s9, 0
    %11 = vsyncpa [#allocation5], 0
    loop: start=0, step=1, limit=4
    $region2: #{self_attention_forward.6} parent=1 // loop_pre_header
      _
    $region3: #{self_attention_forward.6} parent=1 // loop_header
      %s13 = sphi 0, %s17
      %p14 = scmp.ge.s32.totalorder %s13, 4
      %s20 = sphi 0, %s39
      %s21 = sphi 0, %s35
      %s22 = sphi 0, %s31
      %s23 = sphi 0, %s20
      %s24 = sphi 0, %s21
      %s25 = sphi 0, %s22
      %s26 = sphi 0, %s23
      %s27 = sphi 0, %s24
      %s28 = sphi 0, %s25
      %s44 = sphi 0, %s46
      %s47 = sphi 0, %s44
      %s48 = sphi 0, %s47
      %s64 = sphi 0, %s48
      %s70 = sphi 0, %s72
      %s73 = sphi 0, %s70
      %s74 = sphi 0, %s73
      %s90 = sphi 0, %s74
      %s96 = sphi 0, %s98
      %s99 = sphi 0, %s96
      %s100 = sphi 0, %s99
      %s116 = sphi 0, %s100
      %s126 = sphi 0, %s128
      %s129 = sphi 0, %s126
      %s130 = sphi 0, %s129
      %s146 = sphi 0, %s130
    $region4: #{self_attention_forward.6} parent=1 // loop_header_branch
      %16 = sbr.rel (%p14) target = $region8
    $region5: #{self_attention_forward.6} parent=1 // loop_body
      %s18 = ssub.s32 %s13, 1
      %s19 = ssub.s32 %s13, 2
      %s29 = sadd.s32 1, %s22
      %p30 = scmp.ge.s32.totalorder %s29, 1
      %s31 = scalar_select %p30, 0, %s29
      %s32 = sadd.s32 1, %s21
      %s33 = scalar_select %p30, %s32, %s21
      %p34 = scmp.ge.s32.totalorder %s33, 2
      %s35 = scalar_select %p34, 0, %s33
      %s36 = sadd.s32 1, %s20
      %s37 = scalar_select %p34, %s36, %s20
      %p38 = scmp.ge.s32.totalorder %s37, 1
      %s39 = scalar_select %p38, 0, %s37
      %s40 = ssub.s32 %s21, %s35
      %s41 = ssub.s32 %s22, %s31
      %s42 = sor.u32 %s40, %s41
      %p43 = scmp.eq.s32.totalorder %s42, 0
      %s45 = sadd.s32 %s44, 1
      %s46 = scalar_select %p43, %s44, %s45
      %p49 = pneg %p43
      %p50 = scmp.eq.s32.totalorder %s13, 1
      %p51 = por %p49, %p50
      %p52 = scmp.ne.s32.totalorder %s44, %s47
      %p53 = scmp.eq.s32.totalorder %s13, 0
      %p54 = por %p52, %p53
      %p55 = scmp.ne.s32.totalorder %s44, %s47
      %p56 = scmp.eq.s32.totalorder %s18, 1
      %p57 = por %p55, %p56
      %p58 = scmp.ne.s32.totalorder %s47, %s48
      %p59 = scmp.eq.s32.totalorder %s18, 0
      %p60 = por %p58, %p59
      %p61 = scmp.ne.s32.totalorder %s47, %s48
      %p62 = scmp.eq.s32.totalorder %s19, 1
      %p63 = por %p61, %p62
      %p65 = scmp.ne.s32.totalorder %s48, %s64
      %p66 = scmp.eq.s32.totalorder %s19, 0
      %p67 = por %p65, %p66
      %s68 = ssub.s32 %s20, %s39
      %p69 = scmp.eq.s32.totalorder %s68, 0
      %s71 = sadd.s32 %s70, 1
      %s72 = scalar_select %p69, %s70, %s71
      %p75 = pneg %p69
      %p76 = scmp.eq.s32.totalorder %s13, 1
      %p77 = por %p75, %p76
      %p78 = scmp.ne.s32.totalorder %s70, %s73
      %p79 = scmp.eq.s32.totalorder %s13, 0
      %p80 = por %p78, %p79
      %p81 = scmp.ne.s32.totalorder %s70, %s73
      %p82 = scmp.eq.s32.totalorder %s18, 1
      %p83 = por %p81, %p82
      %p84 = scmp.ne.s32.totalorder %s73, %s74
      %p85 = scmp.eq.s32.totalorder %s18, 0
      %p86 = por %p84, %p85
      %p87 = scmp.ne.s32.totalorder %s73, %s74
      %p88 = scmp.eq.s32.totalorder %s19, 1
      %p89 = por %p87, %p88
      %p91 = scmp.ne.s32.totalorder %s74, %s90
      %p92 = scmp.eq.s32.totalorder %s19, 0
      %p93 = por %p91, %p92
      %s94 = ssub.s32 %s20, %s39
      %p95 = scmp.eq.s32.totalorder %s94, 0
      %s97 = sadd.s32 %s96, 1
      %s98 = scalar_select %p95, %s96, %s97
      %p101 = pneg %p95
      %p102 = scmp.eq.s32.totalorder %s13, 1
      %p103 = por %p101, %p102
      %p104 = scmp.ne.s32.totalorder %s96, %s99
      %p105 = scmp.eq.s32.totalorder %s13, 0
      %p106 = por %p104, %p105
      %p107 = scmp.ne.s32.totalorder %s96, %s99
      %p108 = scmp.eq.s32.totalorder %s18, 1
      %p109 = por %p107, %p108
      %p110 = scmp.ne.s32.totalorder %s99, %s100
      %p111 = scmp.eq.s32.totalorder %s18, 0
      %p112 = por %p110, %p111
      %p113 = scmp.ne.s32.totalorder %s99, %s100
      %p114 = scmp.eq.s32.totalorder %s19, 1
      %p115 = por %p113, %p114
      %p117 = scmp.ne.s32.totalorder %s100, %s116
      %p118 = scmp.eq.s32.totalorder %s19, 0
      %p119 = por %p117, %p118
      %s120 = ssub.s32 %s21, %s35
      %s121 = ssub.s32 %s20, %s39
      %s122 = sor.u32 %s120, %s121
      %s123 = ssub.s32 %s22, %s31
      %s124 = sor.u32 %s122, %s123
      %p125 = scmp.eq.s32.totalorder %s124, 0
      %s127 = sadd.s32 %s126, 1
      %s128 = scalar_select %p125, %s126, %s127
      %p131 = pneg %p125
      %p132 = scmp.eq.s32.totalorder %s13, 1
      %p133 = por %p131, %p132
      %p134 = scmp.ne.s32.totalorder %s126, %s129
      %p135 = scmp.eq.s32.totalorder %s13, 0
      %p136 = por %p134, %p135
      %p137 = scmp.ne.s32.totalorder %s126, %s129
      %p138 = scmp.eq.s32.totalorder %s18, 1
      %p139 = por %p137, %p138
      %p140 = scmp.ne.s32.totalorder %s129, %s130
      %p141 = scmp.eq.s32.totalorder %s18, 0
      %p142 = por %p140, %p141
      %p143 = scmp.ne.s32.totalorder %s129, %s130
      %p144 = scmp.eq.s32.totalorder %s19, 1
      %p145 = por %p143, %p144
      %p147 = scmp.ne.s32.totalorder %s130, %s146
      %p148 = scmp.eq.s32.totalorder %s19, 0
      %p149 = por %p147, %p148
      %p150 = scmp.le.s32.totalorder 1, %s13
      %p151 = scmp.lt.s32.totalorder %s13, 3
      %p152 = pnand %p150, %p151
      %p153 = pneg %p152
      // Predicated region
      $region9: #{self_attention_forward.6} parent=5 // pred_check
        _
      $region10: #{self_attention_forward.6} parent=5 // pred_check_branch
        %155 = sbr.rel (%p152) target = $region12
      $region11: #{self_attention_forward.6} parent=5 // pred_region
        %s156 = ssub.s32 %s13, 1
        // Predicated region
        $region13: #{self_attention_forward.6} parent=11 // pred_check
          %p157 = pneg %p86
        $region14: #{self_attention_forward.6} parent=11 // pred_check_branch
          %159 = sbr.rel (%p157) target = $region16
        $region15: #{self_attention_forward.6} parent=11 // pred_region
          %161 = vsyncadd [#allocation5], 0
          %s162 = smul.addr %s23, 8
          %s163 = scalar_lea.hbm %s1, %s162
          %s164 = sshll.u32 %s163, 4
          %s165 = int_to_ptr.hbm [resolvable:$true] %s164
          %s166 = sshll.u32 [#allocation4], 4
          %s167 = int_to_ptr.vmem [resolvable:$true] %s166
          %172 = dma.hbm_to_vmem [thread:$0]  %s165, 512, %s167, [#allocation5], 128, 128, 8
        $region16: #{self_attention_forward.6} parent=11 // pred_fallthru
          _
        // Predicated region
        $region17: #{self_attention_forward.6} parent=11 // pred_check
          %p173 = pneg %p112
        $region18: #{self_attention_forward.6} parent=11 // pred_check_branch
          %175 = sbr.rel (%p173) target = $region20
        $region19: #{self_attention_forward.6} parent=11 // pred_region
          %177 = vsyncadd [#allocation5], 0
          %s178 = scalar_lea.hbm %s2, %s23
          %s180 = sshll.u32 %s178, 4
          %s181 = int_to_ptr.hbm [resolvable:$true] %s180
          %s182 = sshll.u32 [#allocation6], 4
          %s183 = int_to_ptr.vmem [resolvable:$true] %s182
          %185 = dma.hbm_to_vmem [thread:$0]  %s181, 16, %s183, [#allocation5]
        $region20: #{self_attention_forward.6} parent=11 // pred_fallthru
          _
      $region12: #{self_attention_forward.6} parent=5 // pred_fallthru
        _
      %p186 = scmp.lt.s32.totalorder %s13, 2
      // Predicated region
      $region21: #{self_attention_forward.6} parent=5 // pred_check
        %p187 = pneg %p186
      $region22: #{self_attention_forward.6} parent=5 // pred_check_branch
        %189 = sbr.rel (%p187) target = $region24
      $region23: #{self_attention_forward.6} parent=5 // pred_region
        // Predicated region
        $region25: #{self_attention_forward.6} parent=23 // pred_check
          %p190 = pneg %p54
        $region26: #{self_attention_forward.6} parent=23 // pred_check_branch
          %192 = sbr.rel (%p190) target = $region28
        $region27: #{self_attention_forward.6} parent=23 // pred_region
          %s193 = sand.u32 %s44, 1
          %s194 = scalar_lea.sflag [#allocation3], %s193
          %s195 = sand.u32 %s44, 1
          %s196 = smul.addr %s195, 8
          %s197 = scalar_lea.vmem [#allocation2], %s196
          %199 = vsyncadd %s194, 0
          %s200 = sadd.s32 %s22, %s21
          %s201 = smul.addr %s200, 8
          %s202 = scalar_lea.hbm %s0, %s201
          %s204 = sshll.u32 %s202, 4
          %s205 = int_to_ptr.hbm [resolvable:$true] %s204
          %s206 = sshll.u32 %s197, 4
          %s207 = int_to_ptr.vmem [resolvable:$true] %s206
          %209 = dma.hbm_to_vmem [thread:$0]  %s205, 128, %s207, %s194
        $region28: #{self_attention_forward.6} parent=23 // pred_fallthru
          _
      $region24: #{self_attention_forward.6} parent=5 // pred_fallthru
        _
      %p210 = scmp.le.s32.totalorder 1, %s13
      %p211 = scmp.lt.s32.totalorder %s13, 3
      %p212 = pnand %p210, %p211
      %p213 = pneg %p212
      // Predicated region
      $region29: #{self_attention_forward.6} parent=5 // pred_check
        _
      $region30: #{self_attention_forward.6} parent=5 // pred_check_branch
        %215 = sbr.rel (%p212) target = $region32
      $region31: #{self_attention_forward.6} parent=5 // pred_region
        %s216 = ssub.s32 %s13, 1
        %s217 = sand.u32 %s47, 1
        %s218 = scalar_lea.sflag [#allocation3], %s217
        %s219 = sand.u32 %s47, 1
        %s220 = smul.addr %s219, 8
        %s221 = scalar_lea.vmem [#allocation2], %s220
        // Predicated region
        $region33: #{self_attention_forward.6} parent=31 // pred_check
          %p222 = pneg %p60
        $region34: #{self_attention_forward.6} parent=31 // pred_check_branch
          %224 = sbr.rel (%p222) target = $region36
        $region35: #{self_attention_forward.6} parent=31 // pred_region
          %226 = dma.done %s218, 128
        $region36: #{self_attention_forward.6} parent=31 // pred_fallthru
          _
        // Predicated region
        $region37: #{self_attention_forward.6} parent=31 // pred_check
          %p227 = pneg %p86
        $region38: #{self_attention_forward.6} parent=31 // pred_check_branch
          %229 = sbr.rel (%p227) target = $region40
        $region39: #{self_attention_forward.6} parent=31 // pred_region
          %231 = dma.done [#allocation5], 512
        $region40: #{self_attention_forward.6} parent=31 // pred_fallthru
          _
        // Predicated region
        $region41: #{self_attention_forward.6} parent=31 // pred_check
          %p232 = pneg %p112
        $region42: #{self_attention_forward.6} parent=31 // pred_check_branch
          %234 = sbr.rel (%p232) target = $region44
        $region43: #{self_attention_forward.6} parent=31 // pred_region
          %236 = dma.done [#allocation5], 16
        $region44: #{self_attention_forward.6} parent=31 // pred_fallthru
          _
        %s237 = sand.u32 %s47, 1
        %s238 = scalar_lea.sflag [#allocation3], %s237
        %s239 = sand.u32 %s47, 1
        %s240 = smul.addr %s239, 8
        %s241 = scalar_lea.vmem [#allocation2], %s240
        %p242 = pneg %p60
        %p243 = pneg %p57
        %p244 = pneg %p86
        %p245 = pneg %p83
        %p246 = pneg %p112
        %p247 = pneg %p109
        %p248 = pneg %p142
        %p249 = pneg %p139
        %s250 = smul.u32 4, %s23
        %p251 = scmp.lt.s32.totalorder %s24, 1
        %s252 = scalar_select %p251, %s24, 1
        %p253 = scmp.lt.s32.totalorder %s250, 3
        %s254 = scalar_select %p253, %s250, 3
        %p255 = scmp.lt.s32.totalorder %s25, 0
        %s256 = scalar_select %p255, %s25, 0
        %s257 = sadd.s32 %s256, %s254
        %s258 = smul.addr %s252, 4
        %s259 = sadd.s32 %s257, %s258
        %s260 = smul.addr %s259, 8
        %s261 = scalar_lea.vmem %s3, %s260
        %s262 = smul.u32 4, %s23
        %p263 = scmp.lt.s32.totalorder %s24, 1
        %s264 = scalar_select %p263, %s24, 1
        %p265 = scmp.lt.s32.totalorder %s262, 3
        %s266 = scalar_select %p265, %s262, 3
        %p267 = scmp.lt.s32.totalorder %s25, 0
        %s268 = scalar_select %p267, %s25, 0
        %s269 = sadd.s32 %s268, %s266
        %s270 = smul.addr %s264, 4
        %s271 = sadd.s32 %s269, %s270
        %s272 = smul.addr %s271, 8
        %s273 = scalar_lea.vmem %s3, %s272
        %s274 = smul.u32 4, %s23
        %v275 = vld [vmem:[%s221] sm:$0xff]
        %v276 = vld [vmem:[#allocation4] sm:$0xff]
        %v277 = vld [vmem:[#allocation4 + $0x8] sm:$0xff]
        %v278 = vld [vmem:[#allocation4 + $0x10] sm:$0xff]
        %v279 = vld [vmem:[#allocation4 + $0x18] sm:$0xff]
        %v280 = vld [vmem:[#allocation6] sm:$0x1]
        %v282 = vperm.slane %v280, 0
        %vm284 = vcmask 261120
        %v286 = vsel %vm284, %v275, 0
        %288 = vmatpush.msra.mxu0 0.0
        %289 = vmatpush.msra.mxu0 0.0
        %290 = vmatpush.msra.mxu0 0.0
        %291 = vmatpush.msra.mxu0 0.0
        %292 = vmatpush.msra.mxu0 0.0
        %293 = vmatpush.msra.mxu0 0.0
        %294 = vmatpush.msra.mxu0 0.0
        %295 = vmatpush.msra.mxu0 0.0
        %296 = vmatpush.msra.mxu0 0.0
        %297 = vmatpush.msra.mxu0 0.0
        %298 = vmatpush.msra.mxu0 0.0
        %299 = vmatpush.msra.mxu0 0.0
        %300 = vmatpush.msra.mxu0 %v279
        %301 = vmatpush.msra.mxu0 %v278
        %302 = vmatpush.msra.mxu0 %v277
        %303 = vmatpush.msra.mxu0 %v276
        %304 = vmatmul.f32.gmra.mxu0 %v286
        %v305 = vpop.f32.mrf.mxu0
        %v306 = vadd.f32 %v282, %v305
        %307 = vdwg.mxu0
        %vm308 = vcmask 64512
        %309 = vst.msk [vmem:[%s273] sm:$0xff] %vm308, %v306
        %311 = vrot.lane.b32.xlu0 %v306, 120
        %v312 = vpop.permute.xlu0 %311
        %s314 = scalar_lea.vmem %s273, 8
        %315 = vst.msk [vmem:[%s314] sm:$0xff] %vm308, %v312
        %316 = vrot.lane.b32.xlu0 %v306, 112
        %v317 = vpop.permute.xlu0 %316
        %s319 = scalar_lea.vmem %s273, 16
        %320 = vst.msk [vmem:[%s319] sm:$0xff] %vm308, %v317
        %321 = vrot.lane.b32.xlu0 %v306, 104
        %v322 = vpop.permute.xlu0 %321
        %s324 = scalar_lea.vmem %s273, 24
        %325 = vst.msk [vmem:[%s324] sm:$0xff] %vm308, %v322
        %s326 = smul.u32 4, %s23
        %p327 = scmp.lt.s32.totalorder %s24, 1
        %s328 = scalar_select %p327, %s24, 1
        %p329 = scmp.lt.s32.totalorder %s326, 3
        %s330 = scalar_select %p329, %s326, 3
        %p331 = scmp.lt.s32.totalorder %s25, 0
        %s332 = scalar_select %p331, %s25, 0
        %s333 = sadd.s32 %s332, %s330
        %s334 = smul.addr %s328, 4
        %s335 = sadd.s32 %s333, %s334
        %s336 = smul.addr %s335, 8
        %s337 = scalar_lea.vmem %s3, %s336
        // Predicated region
        $region45: #{self_attention_forward.6} parent=31 // pred_check
          %p338 = pneg %p139
        $region46: #{self_attention_forward.6} parent=31 // pred_check_branch
          %340 = sbr.rel (%p338) target = $region48
        $region47: #{self_attention_forward.6} parent=31 // pred_region
          %s341 = smul.u32 4, %s23
        $region48: #{self_attention_forward.6} parent=31 // pred_fallthru
          _
      $region32: #{self_attention_forward.6} parent=5 // pred_fallthru
        _
      %p342 = scmp.le.s32.totalorder 2, %s13
      // Predicated region
      $region49: #{self_attention_forward.6} parent=5 // pred_check
        %p343 = pneg %p342
      $region50: #{self_attention_forward.6} parent=5 // pred_check_branch
        %345 = sbr.rel (%p343) target = $region52
      $region51: #{self_attention_forward.6} parent=5 // pred_region
        %s346 = ssub.s32 %s13, 2
        // Predicated region
        $region53: #{self_attention_forward.6} parent=51 // pred_check
          %p347 = pneg %p145
        $region54: #{self_attention_forward.6} parent=51 // pred_check_branch
          %349 = sbr.rel (%p347) target = $region56
        $region55: #{self_attention_forward.6} parent=51 // pred_region
          %s350 = smul.u32 4, %s26
          %p351 = scmp.lt.s32.totalorder %s27, 1
          %s352 = scalar_select %p351, %s27, 1
          %p353 = scmp.lt.s32.totalorder %s350, 3
          %s354 = scalar_select %p353, %s350, 3
          %p355 = scmp.lt.s32.totalorder %s28, 0
          %s356 = scalar_select %p355, %s28, 0
          %s357 = sadd.s32 %s356, %s354
          %s358 = smul.addr %s352, 4
          %s359 = sadd.s32 %s357, %s358
          %s360 = smul.addr %s359, 8
          %s361 = scalar_lea.vmem %s3, %s360
        $region56: #{self_attention_forward.6} parent=51 // pred_fallthru
          _
      $region52: #{self_attention_forward.6} parent=5 // pred_fallthru
        _
    $region6: #{self_attention_forward.6} parent=1 // loop_footer
      %s17 = sadd.s32 1, %s13
    $region7: #{self_attention_forward.6} parent=1 // loop_footer_branch
      %12 = sbr.rel target = $region3
    $region8: #{self_attention_forward.6} parent=1 // loop_exit
      _
    %362 = vsyncpa [#allocation3], 1
    %s363 = scalar_lea.sflag [#allocation3], 1
    %364 = vsyncpa %s363, 1
    %365 = vsyncpa [#allocation5], 1

</llo_original>
